<compile_context>
chip_gen: v7x
topology: tpu7x:2x2x1
jax: 0.10.0
libtpu: 0.0.40
codegen_flags: <defaults>
</compile_context>

<pallas_src>
import functools

import jax
import jax.numpy as jnp
from jax import lax
from jax.experimental import pallas as pl
from jax.experimental.pallas import tpu as pltpu


# ---------------------------------------------------------------------------
# Fused diffusion + classifier kernel (gridless, single invocation)
# ---------------------------------------------------------------------------

def _hypernd_kernel(x_ref, h_ref, ht_ref, dis_ref, dis2_ref, dsqrt_ref, dei_ref,
                    w1_ref, b1_ref, w2_ref, b2_ref,
                    out_ref, d_ref, steps_ref,
                    *, p, alpha, tol, max_steps):
    """Everything (X, H, HT, scalers, MLP weights) resident in VMEM.

    dis   : (N,1) D^{-1/2}      dis2 : (N,1) 1/D      dsqrt : (N,1) D^{1/2}
    dei   : (E,1) 1/DE
    """
    eps = 1e-30
    dis = dis_ref[...]
    dis2 = dis2_ref[...]
    dsqrt = dsqrt_ref[...]
    dei = dei_ref[...]
    Hb = h_ref[...]          # (E, N) bf16
    HTb = ht_ref[...]        # (N, E) bf16

    def rho(z):              # z ** p   (iterates stay >= 0: X >= 0, H binary)
        if p == 2.0:
            return z * z
        return jnp.power(z, p)

    def sigma(y_raw):        # (y / DE) ** (1/p)
        y = jnp.maximum(y_raw, 0.0) * dei
        if p == 2.0:
            return jnp.sqrt(y)
        return jnp.power(y, 1.0 / p)

    # ---- init: phi(X), U = X/phi(X), F0 = U, Xe0 = V2E(F0) ------------------
    X = x_ref[...]
    Zx = X * dis
    pe_raw = jnp.dot(Hb, rho(Zx).astype(jnp.bfloat16),
                     preferred_element_type=jnp.float32)
    Pe = sigma(pe_raw)                                   # = V2E(X)
    # phi(Z) = 2*sqrt(sum_e ||V2E(Z)_e||^2)  ->  1/phi = 0.5*rsqrt(sum Pe^2)
    inv_phi0 = 0.5 * lax.rsqrt(jnp.sum(Pe * Pe) + eps)
    F0 = X * inv_phi0                                    # U
    Xe0 = (Pe * inv_phi0).astype(jnp.bfloat16)           # = V2E(U)
    Ua_dis = (alpha * inv_phi0) * Zx                     # alpha * U * dis

    one_m_alpha = 1.0 - alpha
    tol2 = tol * tol

    # ---- diffusion loop: true early exit via lax.while_loop -----------------
    def cond(carry):
        i, _f, _xe, sd, sf = carry
        return jnp.logical_and(i < max_steps, sd >= tol2 * sf)

    def body(carry):
        i, f, xe, _sd, _sf = carry
        # E2V of the carried Xe = V2E(F)  (raw, dis folded into Zg below)
        xv_raw = jnp.dot(HTb, xe, preferred_element_type=jnp.float32)
        # Zg = G*dis with G = (1-a)*E2V(V2E(F)) + a*U, in one fused pass
        zg = one_m_alpha * xv_raw * dis2 + Ua_dis
        # phi(G); this matmul doubles as V2E of the NEXT iterate.
        pe_raw_i = jnp.dot(Hb, rho(zg).astype(jnp.bfloat16),
                           preferred_element_type=jnp.float32)
        pe = sigma(pe_raw_i)
        inv_phi = 0.5 * lax.rsqrt(jnp.sum(pe * pe) + eps)
        fn = zg * (dsqrt * inv_phi)                      # = G / phi(G)
        xe_n = (pe * inv_phi).astype(jnp.bfloat16)       # = V2E(fn)
        diff = fn - f
        sd = jnp.sum(diff * diff)
        sf = jnp.sum(fn * fn)
        return (i + 1, fn, xe_n, sd, sf)

    carry0 = (jnp.int32(0), F0, Xe0, jnp.float32(1.0), jnp.float32(0.0))
    steps, F, _xe, sd, sf = lax.while_loop(cond, body, carry0)

    d_ref[0] = jnp.sqrt(sd) * lax.rsqrt(sf + eps)        # final residual only
    steps_ref[0] = steps

    # ---- 2-layer MLP classifier (dropout = eval no-op, no normalization) ----
    h1 = jnp.dot(F.astype(jnp.bfloat16), w1_ref[...],
                 preferred_element_type=jnp.float32) + b1_ref[...]
    h1 = jnp.maximum(h1, 0.0)
    out_ref[...] = jnp.dot(h1.astype(jnp.bfloat16), w2_ref[...],
                           preferred_element_type=jnp.float32) + b2_ref[...]


# ---------------------------------------------------------------------------
# Wrapper: padding to lane-dense shapes + single gridless pallas_call
# ---------------------------------------------------------------------------

def _round_up(x, m):
    return ((x + m - 1) // m) * m


def _pad2(a, r, c):
    return jnp.pad(a, ((0, r - a.shape[0]), (0, c - a.shape[1])))


@functools.partial(jax.jit,
                   static_argnames=("p", "alpha", "tol", "max_steps", "self_loop"))
def hypernd_forward(X, H, params, *, p, alpha, tol, max_steps, self_loop=1):
    """X: (N, F) non-negative node features; H: (E, N) dense incidence (0/1)."""
    N, F = X.shape
    E = H.shape[0]
    W1, b1, W2, b2 = params
    hidden = W1.shape[1]
    C = W2.shape[1]

    LANE = 128
    Fp = _round_up(F, LANE)
    Hd = _round_up(hidden, LANE)
    Cp = _round_up(C, LANE)
    Np = _round_up(N, LANE)
    Ep = _round_up(E, LANE)

    Hf = H.astype(jnp.float32)
    # Degrees (aggregate='add' scatter) + self loop.
    D = jnp.sum(Hf, axis=0) + float(self_loop)            # (N,) node degrees
    DE = jnp.sum(Hf, axis=1) + float(self_loop)           # (E,) edge sizes

    dis = jnp.pad(D ** -0.5, (0, Np - N), constant_values=1.0).reshape(Np, 1)
    dis2 = jnp.pad(1.0 / D, (0, Np - N), constant_values=1.0).reshape(Np, 1)
    dsqrt = jnp.pad(D ** 0.5, (0, Np - N), constant_values=1.0).reshape(Np, 1)
    dei = jnp.pad(1.0 / DE, (0, Ep - E), constant_values=1.0).reshape(Ep, 1)
    dis, dis2, dsqrt, dei = (a.astype(jnp.float32) for a in (dis, dis2, dsqrt, dei))

    Xp = _pad2(X.astype(jnp.float32), Np, Fp)
    Hpad = _pad2(Hf, Ep, Np)
    Hb = Hpad.astype(jnp.bfloat16)                         # (E, N) bf16
    HTb = Hpad.T.astype(jnp.bfloat16)                      # (N, E) bf16
    # TODO(synk): on a VMEM-bound v7x config, drop HTb and contract H's E dim
    # with lax.dot_general instead of carrying the transposed copy.

    W1b = _pad2(W1, Fp, Hd).astype(jnp.bfloat16)
    b1p = _pad2(b1.astype(jnp.float32), 1, Hd)
    W2b = _pad2(W2, Hd, Cp).astype(jnp.bfloat16)
    b2p = _pad2(b2.astype(jnp.float32), 1, Cp)

    nsteps = max(int(max_steps), 1)
    kern = functools.partial(_hypernd_kernel, p=float(p), alpha=float(alpha),
                             tol=float(tol), max_steps=nsteps)

    # Advisory cost estimate (2 incidence matmuls / step + init + classifier).
    mm = 2 * Ep * Np * Fp
    flops = mm * (1 + 2 * nsteps) + 2 * Np * Fp * Hd + 2 * Np * Hd * Cp
    transcendentals = (1 + nsteps) * Ep * Fp
    bytes_accessed = (Np * Fp * 4 + 2 * Ep * Np * 2 + 3 * Np * 4 + Ep * 4
                      + Fp * Hd * 2 + Hd * 4 + Hd * Cp * 2 + Cp * 4
                      + Np * Cp * 4 + 8)

    vmem_specs = [pl.BlockSpec(memory_space=pltpu.MemorySpace.VMEM)] * 11
    out_pad, d, steps = pl.pallas_call(
        kern,
        out_shape=(
            jax.ShapeDtypeStruct((Np, Cp), jnp.float32),   # logits (padded)
            jax.ShapeDtypeStruct((1,), jnp.float32),       # final residual d
            jax.ShapeDtypeStruct((1,), jnp.int32),         # diffusion steps run
        ),
        in_specs=vmem_specs,
        out_specs=(
            pl.BlockSpec(memory_space=pltpu.MemorySpace.VMEM),
            pl.BlockSpec(memory_space=pltpu.MemorySpace.SMEM),
            pl.BlockSpec(memory_space=pltpu.MemorySpace.SMEM),
        ),
        compiler_params=pltpu.CompilerParams(
            vmem_limit_bytes=64 * 1024 * 1024),
        cost_estimate=pl.CostEstimate(flops=int(flops),
                                      transcendentals=int(transcendentals),
                                      bytes_accessed=int(bytes_accessed)),
    )(Xp, Hb, HTb, dis, dis2, dsqrt, dei, W1b, b1p, W2b, b2p)

    return out_pad[:N, :C], d, steps


# ---------------------------------------------------------------------------
# Main
# ---------------------------------------------------------------------------

if __name__ == "__main__":
    key = jax.random.PRNGKey(0)
    k_x, k_h, k_w1, k_w2 = jax.random.split(key, 4)

    # Small synthetic hypergraph: N nodes, E hyperedges.
    N, E = 32, 8
    num_features = 32
    hidden = 32
    num_classes = 4

    # HyperND hyper-params (args.*)
    p = 2.0            # HyperND_ord
    alpha = 0.1        # restart_alpha
    tol = 1e-4         # HyperND_tol
    max_steps = 10     # HyperND_steps
    # aggregate = 'add' (dense-matmul formulation of scatter)

    # Non-negative features (x**p needs x >= 0 in the HyperND setting).
    X = jax.random.uniform(k_x, (N, num_features), dtype=jnp.float32)
    # Dense binary incidence matrix H (E, N).
    H = (jax.random.uniform(k_h, (E, N)) < 0.3).astype(jnp.float32)

    # Deterministic MLP parameter init (Kaiming-ish scaling).
    W1 = jax.random.normal(k_w1, (num_features, hidden), jnp.float32) \
        * (2.0 / num_features) ** 0.5
    b1 = jnp.zeros((1, hidden), jnp.float32)
    W2 = jax.random.normal(k_w2, (hidden, num_classes), jnp.float32) \
        * (2.0 / hidden) ** 0.5
    b2 = jnp.zeros((1, num_classes), jnp.float32)

    out, d, steps = hypernd_forward(X, H, (W1, b1, W2, b2),
                                    p=p, alpha=alpha, tol=tol,
                                    max_steps=max_steps)
    jax.block_until_ready(out)
    assert out.shape == (N, num_classes)
    assert bool(jnp.all(jnp.isfinite(out)))
    assert bool(jnp.isfinite(d[0]))
    assert 1 <= int(steps[0]) <= max_steps
    print("KERNEL_OK")
</pallas_src>

<mosaic_0001>
module attributes {stable_mosaic.version = 11 : i64} {
  func.func @_hypernd_kernel(%arg0: memref<128x128xf32, #tpu.memory_space<vmem>>, %arg1: memref<128x128xbf16, #tpu.memory_space<vmem>>, %arg2: memref<128x128xbf16, #tpu.memory_space<vmem>>, %arg3: memref<128x1xf32, #tpu.memory_space<vmem>>, %arg4: memref<128x1xf32, #tpu.memory_space<vmem>>, %arg5: memref<128x1xf32, #tpu.memory_space<vmem>>, %arg6: memref<128x1xf32, #tpu.memory_space<vmem>>, %arg7: memref<128x128xbf16, #tpu.memory_space<vmem>>, %arg8: memref<1x128xf32, #tpu.memory_space<vmem>>, %arg9: memref<128x128xbf16, #tpu.memory_space<vmem>>, %arg10: memref<1x128xf32, #tpu.memory_space<vmem>>, %arg11: memref<128x128xf32, #tpu.memory_space<vmem>>, %arg12: memref<1xf32, #tpu.memory_space<smem>>, %arg13: memref<1xi32, #tpu.memory_space<smem>>) attributes {dimension_semantics = [], scalar_prefetch = 0 : i64, scratch_operands = 0 : i64, tpu.core_type = #tpu.core_type<tc>} {
    %c0 = arith.constant 0 : index
    %c0_0 = arith.constant 0 : index
    %0 = vector.load %arg3[%c0, %c0_0] : memref<128x1xf32, #tpu.memory_space<vmem>>, vector<128x1xf32>
    %c0_1 = arith.constant 0 : index
    %c0_2 = arith.constant 0 : index
    %1 = vector.load %arg4[%c0_1, %c0_2] : memref<128x1xf32, #tpu.memory_space<vmem>>, vector<128x1xf32>
    %c0_3 = arith.constant 0 : index
    %c0_4 = arith.constant 0 : index
    %2 = vector.load %arg5[%c0_3, %c0_4] : memref<128x1xf32, #tpu.memory_space<vmem>>, vector<128x1xf32>
    %c0_5 = arith.constant 0 : index
    %c0_6 = arith.constant 0 : index
    %3 = vector.load %arg6[%c0_5, %c0_6] : memref<128x1xf32, #tpu.memory_space<vmem>>, vector<128x1xf32>
    %c0_7 = arith.constant 0 : index
    %c0_8 = arith.constant 0 : index
    %4 = vector.load %arg1[%c0_7, %c0_8] : memref<128x128xbf16, #tpu.memory_space<vmem>>, vector<128x128xbf16>
    %c0_9 = arith.constant 0 : index
    %c0_10 = arith.constant 0 : index
    %5 = vector.load %arg2[%c0_9, %c0_10] : memref<128x128xbf16, #tpu.memory_space<vmem>>, vector<128x128xbf16>
    %c0_11 = arith.constant 0 : index
    %c0_12 = arith.constant 0 : index
    %6 = vector.load %arg0[%c0_11, %c0_12] : memref<128x128xf32, #tpu.memory_space<vmem>>, vector<128x128xf32>
    %7 = vector.broadcast %0 : vector<128x1xf32> to vector<128x128xf32>
    %8 = arith.mulf %6, %7 : vector<128x128xf32>
    %9 = arith.mulf %8, %8 : vector<128x128xf32>
    %10 = arith.truncf %9 : vector<128x128xf32> to vector<128x128xbf16>
    %cst = arith.constant dense<0.000000e+00> : vector<128x128xf32>
    %11 = tpu.matmul %4, %10, %cst {dimension_numbers = #tpu.dot_dimension_numbers<[1], [0], [0], [1], [0, 0, 1, 1], [], []>} : vector<128x128xbf16>, vector<128x128xbf16>, vector<128x128xf32> -> vector<128x128xf32>
    %cst_13 = arith.constant 0.000000e+00 : f32
    %12 = vector.broadcast %cst_13 : f32 to vector<128x128xf32>
    %13 = arith.maximumf %11, %12 : vector<128x128xf32>
    %14 = vector.broadcast %3 : vector<128x1xf32> to vector<128x128xf32>
    %15 = arith.mulf %13, %14 : vector<128x128xf32>
    %16 = math.sqrt %15 : vector<128x128xf32>
    %17 = arith.mulf %16, %16 : vector<128x128xf32>
    %18 = vector.shape_cast %17 : vector<128x128xf32> to vector<1x128x128xf32>
    %cst_14 = arith.constant dense<0.000000e+00> : vector<1xf32>
    %19 = vector.multi_reduction <add>, %18, %cst_14 [1, 2] : vector<1x128x128xf32> to vector<1xf32>
    %20 = vector.shape_cast %19 : vector<1xf32> to vector<1x1x1xf32>
    %21 = vector.extract %20[0, 0, 0] : f32 from vector<1x1x1xf32>
    %cst_15 = arith.constant 1.000000e-30 : f32
    %22 = arith.addf %21, %cst_15 : f32
    %23 = math.rsqrt %22 : f32
    %cst_16 = arith.constant 5.000000e-01 : f32
    %24 = arith.mulf %cst_16, %23 : f32
    %25 = vector.broadcast %24 : f32 to vector<128x128xf32>
    %26 = arith.mulf %6, %25 : vector<128x128xf32>
    %27 = vector.broadcast %24 : f32 to vector<128x128xf32>
    %28 = arith.mulf %16, %27 : vector<128x128xf32>
    %29 = arith.truncf %28 : vector<128x128xf32> to vector<128x128xbf16>
    %cst_17 = arith.constant 1.000000e-01 : f32
    %30 = arith.mulf %cst_17, %24 : f32
    %31 = vector.broadcast %30 : f32 to vector<128x128xf32>
    %32 = arith.mulf %31, %8 : vector<128x128xf32>
    %c0_i32 = arith.constant 0 : i32
    %cst_18 = arith.constant 1.000000e+00 : f32
    %cst_19 = arith.constant 0.000000e+00 : f32
    %33:5 = scf.while (%arg14 = %c0_i32, %arg15 = %26, %arg16 = %29, %arg17 = %cst_18, %arg18 = %cst_19) : (i32, vector<128x128xf32>, vector<128x128xbf16>, f32, f32) -> (i32, vector<128x128xf32>, vector<128x128xbf16>, f32, f32) {
      %c10_i32 = arith.constant 10 : i32
      %55 = arith.cmpi slt, %arg14, %c10_i32 : i32
      %cst_36 = arith.constant 9.99999993E-9 : f32
      %56 = arith.mulf %cst_36, %arg18 : f32
      %57 = arith.cmpf oge, %arg17, %56 : f32
      %58 = arith.andi %55, %57 : i1
      scf.condition(%58) %arg14, %arg15, %arg16, %arg17, %arg18 : i32, vector<128x128xf32>, vector<128x128xbf16>, f32, f32
    } do {
    ^bb0(%arg14: i32, %arg15: vector<128x128xf32>, %arg16: vector<128x128xbf16>, %arg17: f32, %arg18: f32):
      %cst_36 = arith.constant dense<0.000000e+00> : vector<128x128xf32>
      %55 = tpu.matmul %5, %arg16, %cst_36 {dimension_numbers = #tpu.dot_dimension_numbers<[1], [0], [0], [1], [0, 0, 1, 1], [], []>} : vector<128x128xbf16>, vector<128x128xbf16>, vector<128x128xf32> -> vector<128x128xf32>
      %cst_37 = arith.constant 0.899999976 : f32
      %56 = vector.broadcast %cst_37 : f32 to vector<128x128xf32>
      %57 = arith.mulf %56, %55 : vector<128x128xf32>
      %58 = vector.broadcast %1 : vector<128x1xf32> to vector<128x128xf32>
      %59 = arith.mulf %57, %58 : vector<128x128xf32>
      %60 = arith.addf %59, %32 : vector<128x128xf32>
      %61 = arith.mulf %60, %60 : vector<128x128xf32>
      %62 = arith.truncf %61 : vector<128x128xf32> to vector<128x128xbf16>
      %cst_38 = arith.constant dense<0.000000e+00> : vector<128x128xf32>
      %63 = tpu.matmul %4, %62, %cst_38 {dimension_numbers = #tpu.dot_dimension_numbers<[1], [0], [0], [1], [0, 0, 1, 1], [], []>} : vector<128x128xbf16>, vector<128x128xbf16>, vector<128x128xf32> -> vector<128x128xf32>
      %cst_39 = arith.constant 0.000000e+00 : f32
      %64 = vector.broadcast %cst_39 : f32 to vector<128x128xf32>
      %65 = arith.maximumf %63, %64 : vector<128x128xf32>
      %66 = vector.broadcast %3 : vector<128x1xf32> to vector<128x128xf32>
      %67 = arith.mulf %65, %66 : vector<128x128xf32>
      %68 = math.sqrt %67 : vector<128x128xf32>
      %69 = arith.mulf %68, %68 : vector<128x128xf32>
      %70 = vector.shape_cast %69 : vector<128x128xf32> to vector<1x128x128xf32>
      %cst_40 = arith.constant dense<0.000000e+00> : vector<1xf32>
      %71 = vector.multi_reduction <add>, %70, %cst_40 [1, 2] : vector<1x128x128xf32> to vector<1xf32>
      %72 = vector.shape_cast %71 : vector<1xf32> to vector<1x1x1xf32>
      %73 = vector.extract %72[0, 0, 0] : f32 from vector<1x1x1xf32>
      %cst_41 = arith.constant 1.000000e-30 : f32
      %74 = arith.addf %73, %cst_41 : f32
      %75 = math.rsqrt %74 : f32
      %cst_42 = arith.constant 5.000000e-01 : f32
      %76 = arith.mulf %cst_42, %75 : f32
      %77 = vector.broadcast %76 : f32 to vector<128x1xf32>
      %78 = arith.mulf %2, %77 : vector<128x1xf32>
      %79 = vector.broadcast %78 : vector<128x1xf32> to vector<128x128xf32>
      %80 = arith.mulf %60, %79 : vector<128x128xf32>
      %81 = vector.broadcast %76 : f32 to vector<128x128xf32>
      %82 = arith.mulf %68, %81 : vector<128x128xf32>
      %83 = arith.truncf %82 : vector<128x128xf32> to vector<128x128xbf16>
      %84 = arith.subf %80, %arg15 : vector<128x128xf32>
      %85 = arith.mulf %84, %84 : vector<128x128xf32>
      %86 = vector.shape_cast %85 : vector<128x128xf32> to vector<1x128x128xf32>
      %cst_43 = arith.constant dense<0.000000e+00> : vector<1xf32>
      %87 = vector.multi_reduction <add>, %86, %cst_43 [1, 2] : vector<1x128x128xf32> to vector<1xf32>
      %88 = vector.shape_cast %87 : vector<1xf32> to vector<1x1x1xf32>
      %89 = vector.extract %88[0, 0, 0] : f32 from vector<1x1x1xf32>
      %90 = arith.mulf %80, %80 : vector<128x128xf32>
      %91 = vector.shape_cast %90 : vector<128x128xf32> to vector<1x128x128xf32>
      %cst_44 = arith.constant dense<0.000000e+00> : vector<1xf32>
      %92 = vector.multi_reduction <add>, %91, %cst_44 [1, 2] : vector<1x128x128xf32> to vector<1xf32>
      %93 = vector.shape_cast %92 : vector<1xf32> to vector<1x1x1xf32>
      %94 = vector.extract %93[0, 0, 0] : f32 from vector<1x1x1xf32>
      %c1_i32 = arith.constant 1 : i32
      %95 = arith.addi %arg14, %c1_i32 : i32
      scf.yield %95, %80, %83, %89, %94 : i32, vector<128x128xf32>, vector<128x128xbf16>, f32, f32
    }
    %34 = math.sqrt %33#3 : f32
    %cst_20 = arith.constant 1.000000e-30 : f32
    %35 = arith.addf %33#4, %cst_20 : f32
    %36 = math.rsqrt %35 : f32
    %37 = arith.mulf %34, %36 : f32
    %c0_21 = arith.constant 0 : index
    %38 = memref.load %arg12[%c0_21] : memref<1xf32, #tpu.memory_space<smem>>
    memref.store %37, %arg12[%c0_21] : memref<1xf32, #tpu.memory_space<smem>>
    %c0_22 = arith.constant 0 : index
    %39 = memref.load %arg13[%c0_22] : memref<1xi32, #tpu.memory_space<smem>>
    memref.store %33#0, %arg13[%c0_22] : memref<1xi32, #tpu.memory_space<smem>>
    %40 = arith.truncf %33#1 : vector<128x128xf32> to vector<128x128xbf16>
    %c0_23 = arith.constant 0 : index
    %c0_24 = arith.constant 0 : index
    %41 = vector.load %arg7[%c0_23, %c0_24] : memref<128x128xbf16, #tpu.memory_space<vmem>>, vector<128x128xbf16>
    %cst_25 = arith.constant dense<0.000000e+00> : vector<128x128xf32>
    %42 = tpu.matmul %40, %41, %cst_25 {dimension_numbers = #tpu.dot_dimension_numbers<[1], [0], [0], [1], [0, 0, 1, 1], [], []>} : vector<128x128xbf16>, vector<128x128xbf16>, vector<128x128xf32> -> vector<128x128xf32>
    %c0_26 = arith.constant 0 : index
    %c0_27 = arith.constant 0 : index
    %43 = vector.load %arg8[%c0_26, %c0_27] : memref<1x128xf32, #tpu.memory_space<vmem>>, vector<1x128xf32>
    %44 = vector.broadcast %43 : vector<1x128xf32> to vector<128x128xf32>
    %45 = arith.addf %42, %44 : vector<128x128xf32>
    %cst_28 = arith.constant 0.000000e+00 : f32
    %46 = vector.broadcast %cst_28 : f32 to vector<128x128xf32>
    %47 = arith.maximumf %45, %46 : vector<128x128xf32>
    %48 = arith.truncf %47 : vector<128x128xf32> to vector<128x128xbf16>
    %c0_29 = arith.constant 0 : index
    %c0_30 = arith.constant 0 : index
    %49 = vector.load %arg9[%c0_29, %c0_30] : memref<128x128xbf16, #tpu.memory_space<vmem>>, vector<128x128xbf16>
    %cst_31 = arith.constant dense<0.000000e+00> : vector<128x128xf32>
    %50 = tpu.matmul %48, %49, %cst_31 {dimension_numbers = #tpu.dot_dimension_numbers<[1], [0], [0], [1], [0, 0, 1, 1], [], []>} : vector<128x128xbf16>, vector<128x128xbf16>, vector<128x128xf32> -> vector<128x128xf32>
    %c0_32 = arith.constant 0 : index
    %c0_33 = arith.constant 0 : index
    %51 = vector.load %arg10[%c0_32, %c0_33] : memref<1x128xf32, #tpu.memory_space<vmem>>, vector<1x128xf32>
    %52 = vector.broadcast %51 : vector<1x128xf32> to vector<128x128xf32>
    %53 = arith.addf %50, %52 : vector<128x128xf32>
    %c0_34 = arith.constant 0 : index
    %c0_35 = arith.constant 0 : index
    %54 = vector.load %arg11[%c0_34, %c0_35] : memref<128x128xf32, #tpu.memory_space<vmem>>, vector<128x128xf32>
    tpu.vector_store %arg11[%c0_34, %c0_35], %53 {strides = array<i32>} : memref<128x128xf32, #tpu.memory_space<vmem>>, vector<128x128xf32>,
    return
  }
}

</mosaic_0001>

<llo_original>
// kernel: hypernd_forward.1
$region0: #{hypernd_forward.1}
  #allocation0 [shape = 'u32[]', space=smem, size = 0x4, offset = 0x4, fixed_abs, tag = 'smem constant byte address 0x4 - core index']
  #allocation1 [shape = 'u32[144,128]{1,0:T(1,128)}', space=vmem, size = 0x12000, scoped, tag = 'internal scratch']
  %s0 = inlined_call_operand.hbm [shape: f32[128,128], index: 0, kind: input, shape index: {}]
  %s1 = inlined_call_operand.hbm [shape: bf16[128,128], index: 1, kind: input, shape index: {}]
  %s2 = inlined_call_operand.hbm [shape: bf16[128,128], index: 2, kind: input, shape index: {}]
  %s3 = inlined_call_operand.hbm [shape: f32[128,1], index: 3, kind: input, shape index: {}]
  %s4 = inlined_call_operand.hbm [shape: f32[128,1], index: 4, kind: input, shape index: {}]
  %s5 = inlined_call_operand.hbm [shape: f32[128,1], index: 5, kind: input, shape index: {}]
  %s6 = inlined_call_operand.hbm [shape: f32[128,1], index: 6, kind: input, shape index: {}]
  %s7 = inlined_call_operand.hbm [shape: bf16[128,128], index: 7, kind: input, shape index: {}]
  %s8 = inlined_call_operand.hbm [shape: f32[1,128], index: 8, kind: input, shape index: {}]
  %s9 = inlined_call_operand.hbm [shape: bf16[128,128], index: 9, kind: input, shape index: {}]
  %s10 = inlined_call_operand.hbm [shape: f32[1,128], index: 10, kind: input, shape index: {}]
  %s11 = inlined_call_operand.hbm [shape: f32[128,128], index: 11, kind: output, shape index: {0}]
  %s12 = inlined_call_operand.hbm [shape: f32[1], index: 12, kind: output, shape index: {1}]
  %s13 = inlined_call_operand.hbm [shape: s32[1], index: 13, kind: output, shape index: {2}]
  %14 = xla_tuple %s11, %s12, %s13
  %s15 = sld [smem:[#allocation0]]
  $region121: #{hypernd_forward.1} parent=0
    _
  %s17 = ssub.s32 1, %s15
  %s18 = scalar_select 0, %s17, %s15
  $region1: #{hypernd_forward.1} parent=0
    #allocation2 [shape = 'u8[65536]{0}', space=vmem, size = 0x10000, scoped, tag = 'input window, operand 0, single buffered']
    #allocation3 [shape = 's32[1]{0}', space=sflag, size = 0x4, scoped, tag = 'scoped memory for hypernd_forward.1']
    #allocation4 [shape = 's32[1]{0}', space=sflag, size = 0x4, scoped, tag = 'scoped memory for hypernd_forward.1']
    #allocation5 [shape = 's32[1]{0}', space=sflag, size = 0x4, scoped, tag = 'scoped memory for hypernd_forward.1']
    #allocation6 [shape = 'u8[32768]{0}', space=vmem, size = 0x8000, scoped, tag = 'input window, operand 1, single buffered']
    #allocation7 [shape = 's32[1]{0}', space=sflag, size = 0x4, scoped, tag = 'scoped memory for hypernd_forward.1']
    #allocation8 [shape = 'u8[32768]{0}', space=vmem, size = 0x8000, scoped, tag = 'input window, operand 2, single buffered']
    #allocation9 [shape = 'u8[65536]{0}', space=vmem, size = 0x10000, scoped, tag = 'input window, operand 3, single buffered']
    #allocation10 [shape = 's32[1]{0}', space=sflag, size = 0x4, scoped, tag = 'scoped memory for hypernd_forward.1']
    #allocation11 [shape = 'u8[65536]{0}', space=vmem, size = 0x10000, scoped, tag = 'input window, operand 4, single buffered']
    #allocation12 [shape = 'u8[65536]{0}', space=vmem, size = 0x10000, scoped, tag = 'input window, operand 5, single buffered']
    #allocation13 [shape = 's32[1]{0}', space=sflag, size = 0x4, scoped, tag = 'scoped memory for hypernd_forward.1']
    #allocation14 [shape = 'u8[65536]{0}', space=vmem, size = 0x10000, scoped, tag = 'input window, operand 6, single buffered']
    #allocation15 [shape = 'u8[32768]{0}', space=vmem, size = 0x8000, scoped, tag = 'input window, operand 7, single buffered']
    #allocation16 [shape = 's32[1]{0}', space=sflag, size = 0x4, scoped, tag = 'scoped memory for hypernd_forward.1']
    #allocation17 [shape = 'u8[512]{0}', space=vmem, size = 0x400, scoped, tag = 'input window, operand 8, single buffered']
    #allocation18 [shape = 'u8[32768]{0}', space=vmem, size = 0x8000, scoped, tag = 'input window, operand 9, single buffered']
    #allocation19 [shape = 's32[1]{0}', space=sflag, size = 0x4, scoped, tag = 'scoped memory for hypernd_forward.1']
    #allocation20 [shape = 'u8[512]{0}', space=vmem, size = 0x400, scoped, tag = 'input window, operand 10, single buffered']
    #allocation21 [shape = 'u8[65536]{0}', space=vmem, size = 0x10000, scoped, tag = 'output window, operand 0, single buffered']
    #allocation22 [shape = 'u8[512]{0}', space=smem, size = 0x200, scoped, tag = 'output window, operand 1, single buffered']
    #allocation23 [shape = 'u8[512]{0}', space=smem, size = 0x200, scoped, tag = 'output window, operand 2, single buffered']
    #allocation24 [shape = 's32[1]{0}', space=sflag, size = 0x4, scoped, tag = 'scoped memory for hypernd_forward.1']
    %19 = vsyncpa [#allocation3], 0
    %20 = vsyncpa [#allocation7], 0
    %21 = vsyncpa [#allocation10], 0
    %22 = vsyncpa [#allocation13], 0
    %23 = vsyncpa [#allocation16], 0
    %24 = vsyncpa [#allocation19], 0
    %25 = vsyncpa [#allocation4], 0
    %26 = vsyncpa [#allocation5], 0
    %27 = vsyncpa [#allocation24], 0
    // Predicated region
    $region2: #{hypernd_forward.1} parent=1 // pred_check
      _
    $region3: #{hypernd_forward.1} parent=1 // pred_check_branch
      %29 = sbr.rel (0) target = $region5
    $region4: #{hypernd_forward.1} parent=1 // pred_region
      %s31 = ssub.s32 2048, 2048
      %32 = vsyncadd [#allocation3], %s31
      %s33 = sshll.u32 [#allocation2], 4
      %s34 = int_to_ptr.vmem [resolvable:$true] %s33
      %39 = dma.hbm_to_vmem [thread:$0]  %s0, 2048, %s34, [#allocation3], 128, 128, 8
    $region5: #{hypernd_forward.1} parent=1 // pred_fallthru
      _
    // Predicated region
    $region6: #{hypernd_forward.1} parent=1 // pred_check
      _
    $region7: #{hypernd_forward.1} parent=1 // pred_check_branch
      %41 = sbr.rel (0) target = $region9
    $region8: #{hypernd_forward.1} parent=1 // pred_region
      %s43 = ssub.s32 1024, 1024
      %44 = vsyncadd [#allocation7], %s43
      %s45 = sshll.u32 [#allocation6], 4
      %s46 = int_to_ptr.vmem [resolvable:$true] %s45
      %51 = dma.hbm_to_vmem [thread:$0]  %s1, 1024, %s46, [#allocation7], 64, 64, 4
    $region9: #{hypernd_forward.1} parent=1 // pred_fallthru
      _
    // Predicated region
    $region10: #{hypernd_forward.1} parent=1 // pred_check
      _
    $region11: #{hypernd_forward.1} parent=1 // pred_check_branch
      %53 = sbr.rel (0) target = $region13
    $region12: #{hypernd_forward.1} parent=1 // pred_region
      %s55 = ssub.s32 1024, 1024
      %56 = vsyncadd [#allocation7], %s55
      %s57 = sshll.u32 [#allocation8], 4
      %s58 = int_to_ptr.vmem [resolvable:$true] %s57
      %63 = dma.hbm_to_vmem [thread:$0]  %s2, 1024, %s58, [#allocation7], 64, 64, 4
    $region13: #{hypernd_forward.1} parent=1 // pred_fallthru
      _
    // Predicated region
    $region14: #{hypernd_forward.1} parent=1 // pred_check
      _
    $region15: #{hypernd_forward.1} parent=1 // pred_check_branch
      %65 = sbr.rel (0) target = $region17
    $region16: #{hypernd_forward.1} parent=1 // pred_region
      %s67 = ssub.s32 2048, 2048
      %68 = vsyncadd [#allocation10], %s67
      %s69 = sshll.u32 [#allocation9], 4
      %s70 = int_to_ptr.vmem [resolvable:$true] %s69
      %75 = dma.hbm_to_vmem [thread:$0]  %s3, 2048, %s70, [#allocation10], 128, 128, 8
    $region17: #{hypernd_forward.1} parent=1 // pred_fallthru
      _
    // Predicated region
    $region18: #{hypernd_forward.1} parent=1 // pred_check
      _
    $region19: #{hypernd_forward.1} parent=1 // pred_check_branch
      %77 = sbr.rel (0) target = $region21
    $region20: #{hypernd_forward.1} parent=1 // pred_region
      %s79 = ssub.s32 2048, 2048
      %80 = vsyncadd [#allocation10], %s79
      %s81 = sshll.u32 [#allocation11], 4
      %s82 = int_to_ptr.vmem [resolvable:$true] %s81
      %87 = dma.hbm_to_vmem [thread:$0]  %s4, 2048, %s82, [#allocation10], 128, 128, 8
    $region21: #{hypernd_forward.1} parent=1 // pred_fallthru
      _
    // Predicated region
    $region22: #{hypernd_forward.1} parent=1 // pred_check
      _
    $region23: #{hypernd_forward.1} parent=1 // pred_check_branch
      %89 = sbr.rel (0) target = $region25
    $region24: #{hypernd_forward.1} parent=1 // pred_region
      %s91 = ssub.s32 2048, 2048
      %92 = vsyncadd [#allocation13], %s91
      %s93 = sshll.u32 [#allocation12], 4
      %s94 = int_to_ptr.vmem [resolvable:$true] %s93
      %99 = dma.hbm_to_vmem [thread:$0]  %s5, 2048, %s94, [#allocation13], 128, 128, 8
    $region25: #{hypernd_forward.1} parent=1 // pred_fallthru
      _
    // Predicated region
    $region26: #{hypernd_forward.1} parent=1 // pred_check
      _
    $region27: #{hypernd_forward.1} parent=1 // pred_check_branch
      %101 = sbr.rel (0) target = $region29
    $region28: #{hypernd_forward.1} parent=1 // pred_region
      %s103 = ssub.s32 2048, 2048
      %104 = vsyncadd [#allocation13], %s103
      %s105 = sshll.u32 [#allocation14], 4
      %s106 = int_to_ptr.vmem [resolvable:$true] %s105
      %111 = dma.hbm_to_vmem [thread:$0]  %s6, 2048, %s106, [#allocation13], 128, 128, 8
    $region29: #{hypernd_forward.1} parent=1 // pred_fallthru
      _
    // Predicated region
    $region30: #{hypernd_forward.1} parent=1 // pred_check
      _
    $region31: #{hypernd_forward.1} parent=1 // pred_check_branch
      %113 = sbr.rel (0) target = $region33
    $region32: #{hypernd_forward.1} parent=1 // pred_region
      %s115 = ssub.s32 1024, 1024
      %116 = vsyncadd [#allocation16], %s115
      %s117 = sshll.u32 [#allocation15], 4
      %s118 = int_to_ptr.vmem [resolvable:$true] %s117
      %123 = dma.hbm_to_vmem [thread:$0]  %s7, 1024, %s118, [#allocation16], 64, 64, 4
    $region33: #{hypernd_forward.1} parent=1 // pred_fallthru
      _
    // Predicated region
    $region34: #{hypernd_forward.1} parent=1 // pred_check
      _
    $region35: #{hypernd_forward.1} parent=1 // pred_check_branch
      %125 = sbr.rel (0) target = $region37
    $region36: #{hypernd_forward.1} parent=1 // pred_region
      %s127 = ssub.s32 16, 16
      %128 = vsyncadd [#allocation16], %s127
      %s130 = sshll.u32 [#allocation17], 4
      %s131 = int_to_ptr.vmem [resolvable:$true] %s130
      %133 = dma.hbm_to_vmem [thread:$0]  %s8, 16, %s131, [#allocation16]
    $region37: #{hypernd_forward.1} parent=1 // pred_fallthru
      _
    // Predicated region
    $region38: #{hypernd_forward.1} parent=1 // pred_check
      _
    $region39: #{hypernd_forward.1} parent=1 // pred_check_branch
      %135 = sbr.rel (0) target = $region41
    $region40: #{hypernd_forward.1} parent=1 // pred_region
      %s137 = ssub.s32 1024, 1024
      %138 = vsyncadd [#allocation19], %s137
      %s139 = sshll.u32 [#allocation18], 4
      %s140 = int_to_ptr.vmem [resolvable:$true] %s139
      %145 = dma.hbm_to_vmem [thread:$0]  %s9, 1024, %s140, [#allocation19], 64, 64, 4
    $region41: #{hypernd_forward.1} parent=1 // pred_fallthru
      _
    // Predicated region
    $region42: #{hypernd_forward.1} parent=1 // pred_check
      _
    $region43: #{hypernd_forward.1} parent=1 // pred_check_branch
      %147 = sbr.rel (0) target = $region45
    $region44: #{hypernd_forward.1} parent=1 // pred_region
      %s149 = ssub.s32 16, 16
      %150 = vsyncadd [#allocation19], %s149
      %s152 = sshll.u32 [#allocation20], 4
      %s153 = int_to_ptr.vmem [resolvable:$true] %s152
      %155 = dma.hbm_to_vmem [thread:$0]  %s10, 16, %s153, [#allocation19]
    $region45: #{hypernd_forward.1} parent=1 // pred_fallthru
      _
    // Predicated region
    $region46: #{hypernd_forward.1} parent=1 // pred_check
      _
    $region47: #{hypernd_forward.1} parent=1 // pred_check_branch
      %157 = sbr.rel (0) target = $region49
    $region48: #{hypernd_forward.1} parent=1 // pred_region
      %158 = dma.done [#allocation3], 2048
    $region49: #{hypernd_forward.1} parent=1 // pred_fallthru
      _
    // Predicated region
    $region50: #{hypernd_forward.1} parent=1 // pred_check
      _
    $region51: #{hypernd_forward.1} parent=1 // pred_check_branch
      %160 = sbr.rel (0) target = $region53
    $region52: #{hypernd_forward.1} parent=1 // pred_region
      %161 = dma.done [#allocation7], 1024
    $region53: #{hypernd_forward.1} parent=1 // pred_fallthru
      _
    // Predicated region
    $region54: #{hypernd_forward.1} parent=1 // pred_check
      _
    $region55: #{hypernd_forward.1} parent=1 // pred_check_branch
      %163 = sbr.rel (0) target = $region57
    $region56: #{hypernd_forward.1} parent=1 // pred_region
      %164 = dma.done [#allocation7], 1024
    $region57: #{hypernd_forward.1} parent=1 // pred_fallthru
      _
    // Predicated region
    $region58: #{hypernd_forward.1} parent=1 // pred_check
      _
    $region59: #{hypernd_forward.1} parent=1 // pred_check_branch
      %166 = sbr.rel (0) target = $region61
    $region60: #{hypernd_forward.1} parent=1 // pred_region
      %167 = dma.done [#allocation10], 2048
    $region61: #{hypernd_forward.1} parent=1 // pred_fallthru
      _
    // Predicated region
    $region62: #{hypernd_forward.1} parent=1 // pred_check
      _
    $region63: #{hypernd_forward.1} parent=1 // pred_check_branch
      %169 = sbr.rel (0) target = $region65
    $region64: #{hypernd_forward.1} parent=1 // pred_region
      %170 = dma.done [#allocation10], 2048
    $region65: #{hypernd_forward.1} parent=1 // pred_fallthru
      _
    // Predicated region
    $region66: #{hypernd_forward.1} parent=1 // pred_check
      _
    $region67: #{hypernd_forward.1} parent=1 // pred_check_branch
      %172 = sbr.rel (0) target = $region69
    $region68: #{hypernd_forward.1} parent=1 // pred_region
      %173 = dma.done [#allocation13], 2048
    $region69: #{hypernd_forward.1} parent=1 // pred_fallthru
      _
    // Predicated region
    $region70: #{hypernd_forward.1} parent=1 // pred_check
      _
    $region71: #{hypernd_forward.1} parent=1 // pred_check_branch
      %175 = sbr.rel (0) target = $region73
    $region72: #{hypernd_forward.1} parent=1 // pred_region
      %176 = dma.done [#allocation13], 2048
    $region73: #{hypernd_forward.1} parent=1 // pred_fallthru
      _
    // Predicated region
    $region74: #{hypernd_forward.1} parent=1 // pred_check
      _
    $region75: #{hypernd_forward.1} parent=1 // pred_check_branch
      %178 = sbr.rel (0) target = $region77
    $region76: #{hypernd_forward.1} parent=1 // pred_region
      %179 = dma.done [#allocation16], 1024
    $region77: #{hypernd_forward.1} parent=1 // pred_fallthru
      _
    // Predicated region
    $region78: #{hypernd_forward.1} parent=1 // pred_check
      _
    $region79: #{hypernd_forward.1} parent=1 // pred_check_branch
      %181 = sbr.rel (0) target = $region81
    $region80: #{hypernd_forward.1} parent=1 // pred_region
      %182 = dma.done [#allocation16], 16
    $region81: #{hypernd_forward.1} parent=1 // pred_fallthru
      _
    // Predicated region
    $region82: #{hypernd_forward.1} parent=1 // pred_check
      _
    $region83: #{hypernd_forward.1} parent=1 // pred_check_branch
      %184 = sbr.rel (0) target = $region85
    $region84: #{hypernd_forward.1} parent=1 // pred_region
      %185 = dma.done [#allocation19], 1024
    $region85: #{hypernd_forward.1} parent=1 // pred_fallthru
      _
    // Predicated region
    $region86: #{hypernd_forward.1} parent=1 // pred_check
      _
    $region87: #{hypernd_forward.1} parent=1 // pred_check_branch
      %187 = sbr.rel (0) target = $region89
    $region88: #{hypernd_forward.1} parent=1 // pred_region
      %188 = dma.done [#allocation19], 16
    $region89: #{hypernd_forward.1} parent=1 // pred_fallthru
      _
    %v190 = vld [vmem:[#allocation9] sm:$0xff]
    %v191 = vld [vmem:[#allocation9 + $0x8] sm:$0xff]
    %v192 = vld [vmem:[#allocation9 + $0x10] sm:$0xff]
    %v193 = vld [vmem:[#allocation9 + $0x18] sm:$0xff]
    %v194 = vld [vmem:[#allocation9 + $0x20] sm:$0xff]
    %v195 = vld [vmem:[#allocation9 + $0x28] sm:$0xff]
    %v196 = vld [vmem:[#allocation9 + $0x30] sm:$0xff]
    %v197 = vld [vmem:[#allocation9 + $0x38] sm:$0xff]
    %v198 = vld [vmem:[#allocation9 + $0x40] sm:$0xff]
    %v199 = vld [vmem:[#allocation9 + $0x48] sm:$0xff]
    %v200 = vld [vmem:[#allocation9 + $0x50] sm:$0xff]
    %v201 = vld [vmem:[#allocation9 + $0x58] sm:$0xff]
    %v202 = vld [vmem:[#allocation9 + $0x60] sm:$0xff]
    %v203 = vld [vmem:[#allocation9 + $0x68] sm:$0xff]
    %v204 = vld [vmem:[#allocation9 + $0x70] sm:$0xff]
    %v205 = vld [vmem:[#allocation9 + $0x78] sm:$0xff]
    %v206 = vld [vmem:[#allocation11] sm:$0xff]
    %v207 = vld [vmem:[#allocation11 + $0x8] sm:$0xff]
    %v208 = vld [vmem:[#allocation11 + $0x10] sm:$0xff]
    %v209 = vld [vmem:[#allocation11 + $0x18] sm:$0xff]
    %v210 = vld [vmem:[#allocation11 + $0x20] sm:$0xff]
    %v211 = vld [vmem:[#allocation11 + $0x28] sm:$0xff]
    %v212 = vld [vmem:[#allocation11 + $0x30] sm:$0xff]
    %v213 = vld [vmem:[#allocation11 + $0x38] sm:$0xff]
    %v214 = vld [vmem:[#allocation11 + $0x40] sm:$0xff]
    %v215 = vld [vmem:[#allocation11 + $0x48] sm:$0xff]
    %v216 = vld [vmem:[#allocation11 + $0x50] sm:$0xff]
    %v217 = vld [vmem:[#allocation11 + $0x58] sm:$0xff]
    %v218 = vld [vmem:[#allocation11 + $0x60] sm:$0xff]
    %v219 = vld [vmem:[#allocation11 + $0x68] sm:$0xff]
    %v220 = vld [vmem:[#allocation11 + $0x70] sm:$0xff]
    %v221 = vld [vmem:[#allocation11 + $0x78] sm:$0xff]
    %v222 = vld [vmem:[#allocation12] sm:$0xff]
    %v223 = vld [vmem:[#allocation12 + $0x8] sm:$0xff]
    %v224 = vld [vmem:[#allocation12 + $0x10] sm:$0xff]
    %v225 = vld [vmem:[#allocation12 + $0x18] sm:$0xff]
    %v226 = vld [vmem:[#allocation12 + $0x20] sm:$0xff]
    %v227 = vld [vmem:[#allocation12 + $0x28] sm:$0xff]
    %v228 = vld [vmem:[#allocation12 + $0x30] sm:$0xff]
    %v229 = vld [vmem:[#allocation12 + $0x38] sm:$0xff]
    %v230 = vld [vmem:[#allocation12 + $0x40] sm:$0xff]
    %v231 = vld [vmem:[#allocation12 + $0x48] sm:$0xff]
    %v232 = vld [vmem:[#allocation12 + $0x50] sm:$0xff]
    %v233 = vld [vmem:[#allocation12 + $0x58] sm:$0xff]
    %v234 = vld [vmem:[#allocation12 + $0x60] sm:$0xff]
    %v235 = vld [vmem:[#allocation12 + $0x68] sm:$0xff]
    %v236 = vld [vmem:[#allocation12 + $0x70] sm:$0xff]
    %v237 = vld [vmem:[#allocation12 + $0x78] sm:$0xff]
    %v238 = vld [vmem:[#allocation14] sm:$0xff]
    %v239 = vld [vmem:[#allocation14 + $0x8] sm:$0xff]
    %v240 = vld [vmem:[#allocation14 + $0x10] sm:$0xff]
    %v241 = vld [vmem:[#allocation14 + $0x18] sm:$0xff]
    %v242 = vld [vmem:[#allocation14 + $0x20] sm:$0xff]
    %v243 = vld [vmem:[#allocation14 + $0x28] sm:$0xff]
    %v244 = vld [vmem:[#allocation14 + $0x30] sm:$0xff]
    %v245 = vld [vmem:[#allocation14 + $0x38] sm:$0xff]
    %v246 = vld [vmem:[#allocation14 + $0x40] sm:$0xff]
    %v247 = vld [vmem:[#allocation14 + $0x48] sm:$0xff]
    %v248 = vld [vmem:[#allocation14 + $0x50] sm:$0xff]
    %v249 = vld [vmem:[#allocation14 + $0x58] sm:$0xff]
    %v250 = vld [vmem:[#allocation14 + $0x60] sm:$0xff]
    %v251 = vld [vmem:[#allocation14 + $0x68] sm:$0xff]
    %v252 = vld [vmem:[#allocation14 + $0x70] sm:$0xff]
    %v253 = vld [vmem:[#allocation14 + $0x78] sm:$0xff]
    %v254 = vld [vmem:[#allocation6] sm:$0xf]
    %v255 = vld [vmem:[#allocation6 + $0x4] sm:$0xf]
    %v256 = vld [vmem:[#allocation6 + $0x8] sm:$0xf]
    %v257 = vld [vmem:[#allocation6 + $0xc] sm:$0xf]
    %v258 = vld [vmem:[#allocation6 + $0x10] sm:$0xf]
    %v259 = vld [vmem:[#allocation6 + $0x14] sm:$0xf]
    %v260 = vld [vmem:[#allocation6 + $0x18] sm:$0xf]
    %v261 = vld [vmem:[#allocation6 + $0x1c] sm:$0xf]
    %v262 = vld [vmem:[#allocation6 + $0x20] sm:$0xf]
    %v263 = vld [vmem:[#allocation6 + $0x24] sm:$0xf]
    %v264 = vld [vmem:[#allocation6 + $0x28] sm:$0xf]
    %v265 = vld [vmem:[#allocation6 + $0x2c] sm:$0xf]
    %v266 = vld [vmem:[#allocation6 + $0x30] sm:$0xf]
    %v267 = vld [vmem:[#allocation6 + $0x34] sm:$0xf]
    %v268 = vld [vmem:[#allocation6 + $0x38] sm:$0xf]
    %v269 = vld [vmem:[#allocation6 + $0x3c] sm:$0xf]
    %v270 = vld [vmem:[#allocation8] sm:$0xf]
    %v271 = vld [vmem:[#allocation8 + $0x4] sm:$0xf]
    %v272 = vld [vmem:[#allocation8 + $0x8] sm:$0xf]
    %v273 = vld [vmem:[#allocation8 + $0xc] sm:$0xf]
    %v274 = vld [vmem:[#allocation8 + $0x10] sm:$0xf]
    %v275 = vld [vmem:[#allocation8 + $0x14] sm:$0xf]
    %v276 = vld [vmem:[#allocation8 + $0x18] sm:$0xf]
    %v277 = vld [vmem:[#allocation8 + $0x1c] sm:$0xf]
    %v278 = vld [vmem:[#allocation8 + $0x20] sm:$0xf]
    %v279 = vld [vmem:[#allocation8 + $0x24] sm:$0xf]
    %v280 = vld [vmem:[#allocation8 + $0x28] sm:$0xf]
    %v281 = vld [vmem:[#allocation8 + $0x2c] sm:$0xf]
    %v282 = vld [vmem:[#allocation8 + $0x30] sm:$0xf]
    %v283 = vld [vmem:[#allocation8 + $0x34] sm:$0xf]
    %v284 = vld [vmem:[#allocation8 + $0x38] sm:$0xf]
    %v285 = vld [vmem:[#allocation8 + $0x3c] sm:$0xf]
    %v286 = vld [vmem:[#allocation2] sm:$0xff]
    %v287 = vld [vmem:[#allocation2 + $0x8] sm:$0xff]
    %v288 = vld [vmem:[#allocation2 + $0x10] sm:$0xff]
    %v289 = vld [vmem:[#allocation2 + $0x18] sm:$0xff]
    %v290 = vld [vmem:[#allocation2 + $0x20] sm:$0xff]
    %v291 = vld [vmem:[#allocation2 + $0x28] sm:$0xff]
    %v292 = vld [vmem:[#allocation2 + $0x30] sm:$0xff]
    %v293 = vld [vmem:[#allocation2 + $0x38] sm:$0xff]
    %v294 = vld [vmem:[#allocation2 + $0x40] sm:$0xff]
    %v295 = vld [vmem:[#allocation2 + $0x48] sm:$0xff]
    %v296 = vld [vmem:[#allocation2 + $0x50] sm:$0xff]
    %v297 = vld [vmem:[#allocation2 + $0x58] sm:$0xff]
    %v298 = vld [vmem:[#allocation2 + $0x60] sm:$0xff]
    %v299 = vld [vmem:[#allocation2 + $0x68] sm:$0xff]
    %v300 = vld [vmem:[#allocation2 + $0x70] sm:$0xff]
    %v301 = vld [vmem:[#allocation2 + $0x78] sm:$0xff]
    %303 = vset.pattern.permute.xlu0 0
    %304 = vperm.xlu0 %303, %v190
    %v305 = vpop.permute.xlu0 %304
    %308 = vset.pattern.permute.xlu0 0
    %309 = vperm.xlu0 %308, %v191
    %v310 = vpop.permute.xlu0 %309
    %313 = vset.pattern.permute.xlu0 0
    %314 = vperm.xlu0 %313, %v192
    %v315 = vpop.permute.xlu0 %314
    %318 = vset.pattern.permute.xlu0 0
    %319 = vperm.xlu0 %318, %v193
    %v320 = vpop.permute.xlu0 %319
    %323 = vset.pattern.permute.xlu0 0
    %324 = vperm.xlu0 %323, %v194
    %v325 = vpop.permute.xlu0 %324
    %328 = vset.pattern.permute.xlu0 0
    %329 = vperm.xlu0 %328, %v195
    %v330 = vpop.permute.xlu0 %329
    %333 = vset.pattern.permute.xlu0 0
    %334 = vperm.xlu0 %333, %v196
    %v335 = vpop.permute.xlu0 %334
    %338 = vset.pattern.permute.xlu0 0
    %339 = vperm.xlu0 %338, %v197
    %v340 = vpop.permute.xlu0 %339
    %343 = vset.pattern.permute.xlu0 0
    %344 = vperm.xlu0 %343, %v198
    %v345 = vpop.permute.xlu0 %344
    %348 = vset.pattern.permute.xlu0 0
    %349 = vperm.xlu0 %348, %v199
    %v350 = vpop.permute.xlu0 %349
    %353 = vset.pattern.permute.xlu0 0
    %354 = vperm.xlu0 %353, %v200
    %v355 = vpop.permute.xlu0 %354
    %358 = vset.pattern.permute.xlu0 0
    %359 = vperm.xlu0 %358, %v201
    %v360 = vpop.permute.xlu0 %359
    %363 = vset.pattern.permute.xlu0 0
    %364 = vperm.xlu0 %363, %v202
    %v365 = vpop.permute.xlu0 %364
    %368 = vset.pattern.permute.xlu0 0
    %369 = vperm.xlu0 %368, %v203
    %v370 = vpop.permute.xlu0 %369
    %373 = vset.pattern.permute.xlu0 0
    %374 = vperm.xlu0 %373, %v204
    %v375 = vpop.permute.xlu0 %374
    %378 = vset.pattern.permute.xlu0 0
    %379 = vperm.xlu0 %378, %v205
    %v380 = vpop.permute.xlu0 %379
    %v382 = vmul.f32 %v286, %v305
    %v383 = vmul.f32 %v287, %v310
    %v384 = vmul.f32 %v288, %v315
    %v385 = vmul.f32 %v289, %v320
    %v386 = vmul.f32 %v290, %v325
    %v387 = vmul.f32 %v291, %v330
    %v388 = vmul.f32 %v292, %v335
    %v389 = vmul.f32 %v293, %v340
    %v390 = vmul.f32 %v294, %v345
    %v391 = vmul.f32 %v295, %v350
    %v392 = vmul.f32 %v296, %v355
    %v393 = vmul.f32 %v297, %v360
    %v394 = vmul.f32 %v298, %v365
    %v395 = vmul.f32 %v299, %v370
    %v396 = vmul.f32 %v300, %v375
    %v397 = vmul.f32 %v301, %v380
    %v398 = vmul.f32 %v382, %v382
    %v399 = vmul.f32 %v383, %v383
    %v400 = vmul.f32 %v384, %v384
    %v401 = vmul.f32 %v385, %v385
    %v402 = vmul.f32 %v386, %v386
    %v403 = vmul.f32 %v387, %v387
    %v404 = vmul.f32 %v388, %v388
    %v405 = vmul.f32 %v389, %v389
    %v406 = vmul.f32 %v390, %v390
    %v407 = vmul.f32 %v391, %v391
    %v408 = vmul.f32 %v392, %v392
    %v409 = vmul.f32 %v393, %v393
    %v410 = vmul.f32 %v394, %v394
    %v411 = vmul.f32 %v395, %v395
    %v412 = vmul.f32 %v396, %v396
    %v413 = vmul.f32 %v397, %v397
    %v414 = vpack.c.bf16 %v399, %v398
    %v415 = vpack.c.bf16 %v401, %v400
    %v416 = vpack.c.bf16 %v403, %v402
    %v417 = vpack.c.bf16 %v405, %v404
    %v418 = vpack.c.bf16 %v407, %v406
    %v419 = vpack.c.bf16 %v409, %v408
    %v420 = vpack.c.bf16 %v411, %v410
    %v421 = vpack.c.bf16 %v413, %v412
    %v438 = vunpack.c.l.b16 %v254
    %v439 = vunpack.c.l.b16 %v255
    %v440 = vunpack.c.l.b16 %v256
    %v441 = vunpack.c.l.b16 %v257
    %v442 = vunpack.c.l.b16 %v258
    %v443 = vunpack.c.l.b16 %v259
    %v444 = vunpack.c.l.b16 %v260
    %v445 = vunpack.c.l.b16 %v261
    %v446 = vunpack.c.l.b16 %v262
    %v447 = vunpack.c.l.b16 %v263
    %v448 = vunpack.c.l.b16 %v264
    %v449 = vunpack.c.l.b16 %v265
    %v450 = vunpack.c.l.b16 %v266
    %v451 = vunpack.c.l.b16 %v267
    %v452 = vunpack.c.l.b16 %v268
    %v453 = vunpack.c.l.b16 %v269
    %v454 = vpack.c.b16 %v439, %v438
    %v455 = vpack.c.b16 %v441, %v440
    %v456 = vpack.c.b16 %v443, %v442
    %v457 = vpack.c.b16 %v445, %v444
    %v458 = vpack.c.b16 %v447, %v446
    %v459 = vpack.c.b16 %v449, %v448
    %v460 = vpack.c.b16 %v451, %v450
    %v461 = vpack.c.b16 %v453, %v452
    %470 = vmatprep.subr.bf16.mxu0 0
    %471 = vmatpush1.bf16.msra.mxu0 %v414
    %472 = vmatprep.subr.bf16.mxu0 0
    %473 = vmatpush1.bf16.msra.mxu0 %v415
    %474 = vmatprep.subr.bf16.mxu0 0
    %475 = vmatpush1.bf16.msra.mxu0 %v416
    %476 = vmatprep.subr.bf16.mxu0 0
    %477 = vmatpush1.bf16.msra.mxu0 %v417
    %478 = vmatprep.subr.bf16.mxu0 0
    %479 = vmatpush1.bf16.msra.mxu0 %v418
    %480 = vmatprep.subr.bf16.mxu0 0
    %481 = vmatpush1.bf16.msra.mxu0 %v419
    %482 = vmatprep.subr.bf16.mxu0 0
    %483 = vmatpush1.bf16.msra.mxu0 %v420
    %484 = vmatprep.subr.bf16.mxu0 0
    %485 = vmatpush1.bf16.msra.mxu0 %v421
    %486 = vmatprep.subr.bf16.mxu0 0
    %487 = vmatpush1.bf16.msra.mxu0 0
    %488 = vmatprep.subr.bf16.mxu0 0
    %489 = vmatpush1.bf16.msra.mxu0 0
    %490 = vmatprep.subr.bf16.mxu0 0
    %491 = vmatpush1.bf16.msra.mxu0 0
    %492 = vmatprep.subr.bf16.mxu0 0
    %493 = vmatpush1.bf16.msra.mxu0 0
    %494 = vmatprep.subr.bf16.mxu0 0
    %495 = vmatpush1.bf16.msra.mxu0 0
    %496 = vmatprep.subr.bf16.mxu0 0
    %497 = vmatpush1.bf16.msra.mxu0 0
    %498 = vmatprep.subr.bf16.mxu0 0
    %499 = vmatpush1.bf16.msra.mxu0 0
    %500 = vmatprep.subr.bf16.mxu0 0
    %501 = vmatpush1.bf16.msra.mxu0 0
    %502 = vmatprep.mubr.bf16.mxu0 0
    %503 = vmatmul.mubr.bf16.gmra.mrb[0].mxu0 %v454
    %v504 = vpop.f32.mrb[0].mxu0
    %v505 = vadd.f32 0.0, %v504
    %v506 = vpop.f32.mrb[0].mxu0
    %v507 = vpop.f32.mrb[0].mxu0
    %v508 = vadd.f32 0.0, %v507
    %v509 = vpop.f32.mrb[0].mxu0
    %510 = vmatprep.mubr.bf16.mxu0 0
    %511 = vmatmul.mubr.bf16.gmra.mrb[0].mxu0 %v455
    %v512 = vpop.f32.mrb[0].mxu0
    %v513 = vadd.f32 0.0, %v512
    %v514 = vpop.f32.mrb[0].mxu0
    %v515 = vpop.f32.mrb[0].mxu0
    %v516 = vadd.f32 0.0, %v515
    %v517 = vpop.f32.mrb[0].mxu0
    %518 = vmatprep.mubr.bf16.mxu0 0
    %519 = vmatmul.mubr.bf16.gmra.mrb[0].mxu0 %v456
    %v520 = vpop.f32.mrb[0].mxu0
    %v521 = vadd.f32 0.0, %v520
    %v522 = vpop.f32.mrb[0].mxu0
    %v523 = vpop.f32.mrb[0].mxu0
    %v524 = vadd.f32 0.0, %v523
    %v525 = vpop.f32.mrb[0].mxu0
    %526 = vmatprep.mubr.bf16.mxu0 0
    %527 = vmatmul.mubr.bf16.gmra.mrb[0].mxu0 %v457
    %v528 = vpop.f32.mrb[0].mxu0
    %v529 = vadd.f32 0.0, %v528
    %v530 = vpop.f32.mrb[0].mxu0
    %v531 = vpop.f32.mrb[0].mxu0
    %v532 = vadd.f32 0.0, %v531
    %v533 = vpop.f32.mrb[0].mxu0
    %534 = vmatprep.mubr.bf16.mxu0 0
    %535 = vmatmul.mubr.bf16.gmra.mrb[0].mxu0 %v458
    %v536 = vpop.f32.mrb[0].mxu0
    %v537 = vadd.f32 0.0, %v536
    %v538 = vpop.f32.mrb[0].mxu0
    %v539 = vpop.f32.mrb[0].mxu0
    %v540 = vadd.f32 0.0, %v539
    %v541 = vpop.f32.mrb[0].mxu0
    %542 = vmatprep.mubr.bf16.mxu0 0
    %543 = vmatmul.mubr.bf16.gmra.mrb[0].mxu0 %v459
    %v544 = vpop.f32.mrb[0].mxu0
    %v545 = vadd.f32 0.0, %v544
    %v546 = vpop.f32.mrb[0].mxu0
    %v547 = vpop.f32.mrb[0].mxu0
    %v548 = vadd.f32 0.0, %v547
    %v549 = vpop.f32.mrb[0].mxu0
    %550 = vmatprep.mubr.bf16.mxu0 0
    %551 = vmatmul.mubr.bf16.gmra.mrb[0].mxu0 %v460
    %v552 = vpop.f32.mrb[0].mxu0
    %v553 = vadd.f32 0.0, %v552
    %v554 = vpop.f32.mrb[0].mxu0
    %v555 = vpop.f32.mrb[0].mxu0
    %v556 = vadd.f32 0.0, %v555
    %v557 = vpop.f32.mrb[0].mxu0
    %558 = vmatprep.mubr.bf16.mxu0 0
    %559 = vmatmul.mubr.bf16.gmra.mrb[0].mxu0 %v461
    %v560 = vpop.f32.mrb[0].mxu0
    %v561 = vadd.f32 0.0, %v560
    %v562 = vpop.f32.mrb[0].mxu0
    %v563 = vpop.f32.mrb[0].mxu0
    %v564 = vadd.f32 0.0, %v563
    %v565 = vpop.f32.mrb[0].mxu0
    %566 = vdwg.mxu0
    %v567 = vmax.f32 %v505, 0.0
    %v568 = vmax.f32 %v508, 0.0
    %v569 = vmax.f32 %v513, 0.0
    %v570 = vmax.f32 %v516, 0.0
    %v571 = vmax.f32 %v521, 0.0
    %v572 = vmax.f32 %v524, 0.0
    %v573 = vmax.f32 %v529, 0.0
    %v574 = vmax.f32 %v532, 0.0
    %v575 = vmax.f32 %v537, 0.0
    %v576 = vmax.f32 %v540, 0.0
    %v577 = vmax.f32 %v545, 0.0
    %v578 = vmax.f32 %v548, 0.0
    %v579 = vmax.f32 %v553, 0.0
    %v580 = vmax.f32 %v556, 0.0
    %v581 = vmax.f32 %v561, 0.0
    %v582 = vmax.f32 %v564, 0.0
    %584 = vset.pattern.permute.xlu0 0
    %585 = vperm.xlu0 %584, %v238
    %v586 = vpop.permute.xlu0 %585
    %589 = vset.pattern.permute.xlu0 0
    %590 = vperm.xlu0 %589, %v239
    %v591 = vpop.permute.xlu0 %590
    %594 = vset.pattern.permute.xlu0 0
    %595 = vperm.xlu0 %594, %v240
    %v596 = vpop.permute.xlu0 %595
    %599 = vset.pattern.permute.xlu0 0
    %600 = vperm.xlu0 %599, %v241
    %v601 = vpop.permute.xlu0 %600
    %604 = vset.pattern.permute.xlu0 0
    %605 = vperm.xlu0 %604, %v242
    %v606 = vpop.permute.xlu0 %605
    %609 = vset.pattern.permute.xlu0 0
    %610 = vperm.xlu0 %609, %v243
    %v611 = vpop.permute.xlu0 %610
    %614 = vset.pattern.permute.xlu0 0
    %615 = vperm.xlu0 %614, %v244
    %v616 = vpop.permute.xlu0 %615
    %619 = vset.pattern.permute.xlu0 0
    %620 = vperm.xlu0 %619, %v245
    %v621 = vpop.permute.xlu0 %620
    %624 = vset.pattern.permute.xlu0 0
    %625 = vperm.xlu0 %624, %v246
    %v626 = vpop.permute.xlu0 %625
    %629 = vset.pattern.permute.xlu0 0
    %630 = vperm.xlu0 %629, %v247
    %v631 = vpop.permute.xlu0 %630
    %634 = vset.pattern.permute.xlu0 0
    %635 = vperm.xlu0 %634, %v248
    %v636 = vpop.permute.xlu0 %635
    %639 = vset.pattern.permute.xlu0 0
    %640 = vperm.xlu0 %639, %v249
    %v641 = vpop.permute.xlu0 %640
    %644 = vset.pattern.permute.xlu0 0
    %645 = vperm.xlu0 %644, %v250
    %v646 = vpop.permute.xlu0 %645
    %649 = vset.pattern.permute.xlu0 0
    %650 = vperm.xlu0 %649, %v251
    %v651 = vpop.permute.xlu0 %650
    %654 = vset.pattern.permute.xlu0 0
    %655 = vperm.xlu0 %654, %v252
    %v656 = vpop.permute.xlu0 %655
    %659 = vset.pattern.permute.xlu0 0
    %660 = vperm.xlu0 %659, %v253
    %v661 = vpop.permute.xlu0 %660
    %v663 = vmul.f32 %v567, %v586
    %v664 = vmul.f32 %v568, %v591
    %v665 = vmul.f32 %v569, %v596
    %v666 = vmul.f32 %v570, %v601
    %v667 = vmul.f32 %v571, %v606
    %v668 = vmul.f32 %v572, %v611
    %v669 = vmul.f32 %v573, %v616
    %v670 = vmul.f32 %v574, %v621
    %v671 = vmul.f32 %v575, %v626
    %v672 = vmul.f32 %v576, %v631
    %v673 = vmul.f32 %v577, %v636
    %v674 = vmul.f32 %v578, %v641
    %v675 = vmul.f32 %v579, %v646
    %v676 = vmul.f32 %v580, %v651
    %v677 = vmul.f32 %v581, %v656
    %v678 = vmul.f32 %v582, %v661
    %v679 = vrsqrt.pop %v663
    %v680 = vmul.f32 %v663, %v679
    %vm681 = vcmp.eq.f32.partialorder %v663, inf
    %v682 = vsel %vm681, %v663, %v680
    %vm683 = vcmp.eq.f32.partialorder %v663, 0.0
    %v684 = vand.u32 %v663, 2147483648
    %v685 = vsel %vm683, %v684, %v682
    %v686 = vrsqrt.pop %v664
    %v687 = vmul.f32 %v664, %v686
    %vm688 = vcmp.eq.f32.partialorder %v664, inf
    %v689 = vsel %vm688, %v664, %v687
    %vm690 = vcmp.eq.f32.partialorder %v664, 0.0
    %v691 = vand.u32 %v664, 2147483648
    %v692 = vsel %vm690, %v691, %v689
    %v693 = vrsqrt.pop %v665
    %v694 = vmul.f32 %v665, %v693
    %vm695 = vcmp.eq.f32.partialorder %v665, inf
    %v696 = vsel %vm695, %v665, %v694
    %vm697 = vcmp.eq.f32.partialorder %v665, 0.0
    %v698 = vand.u32 %v665, 2147483648
    %v699 = vsel %vm697, %v698, %v696
    %v700 = vrsqrt.pop %v666
    %v701 = vmul.f32 %v666, %v700
    %vm702 = vcmp.eq.f32.partialorder %v666, inf
    %v703 = vsel %vm702, %v666, %v701
    %vm704 = vcmp.eq.f32.partialorder %v666, 0.0
    %v705 = vand.u32 %v666, 2147483648
    %v706 = vsel %vm704, %v705, %v703
    %v707 = vrsqrt.pop %v667
    %v708 = vmul.f32 %v667, %v707
    %vm709 = vcmp.eq.f32.partialorder %v667, inf
    %v710 = vsel %vm709, %v667, %v708
    %vm711 = vcmp.eq.f32.partialorder %v667, 0.0
    %v712 = vand.u32 %v667, 2147483648
    %v713 = vsel %vm711, %v712, %v710
    %v714 = vrsqrt.pop %v668
    %v715 = vmul.f32 %v668, %v714
    %vm716 = vcmp.eq.f32.partialorder %v668, inf
    %v717 = vsel %vm716, %v668, %v715
    %vm718 = vcmp.eq.f32.partialorder %v668, 0.0
    %v719 = vand.u32 %v668, 2147483648
    %v720 = vsel %vm718, %v719, %v717
    %v721 = vrsqrt.pop %v669
    %v722 = vmul.f32 %v669, %v721
    %vm723 = vcmp.eq.f32.partialorder %v669, inf
    %v724 = vsel %vm723, %v669, %v722
    %vm725 = vcmp.eq.f32.partialorder %v669, 0.0
    %v726 = vand.u32 %v669, 2147483648
    %v727 = vsel %vm725, %v726, %v724
    %v728 = vrsqrt.pop %v670
    %v729 = vmul.f32 %v670, %v728
    %vm730 = vcmp.eq.f32.partialorder %v670, inf
    %v731 = vsel %vm730, %v670, %v729
    %vm732 = vcmp.eq.f32.partialorder %v670, 0.0
    %v733 = vand.u32 %v670, 2147483648
    %v734 = vsel %vm732, %v733, %v731
    %v735 = vrsqrt.pop %v671
    %v736 = vmul.f32 %v671, %v735
    %vm737 = vcmp.eq.f32.partialorder %v671, inf
    %v738 = vsel %vm737, %v671, %v736
    %vm739 = vcmp.eq.f32.partialorder %v671, 0.0
    %v740 = vand.u32 %v671, 2147483648
    %v741 = vsel %vm739, %v740, %v738
    %v742 = vrsqrt.pop %v672
    %v743 = vmul.f32 %v672, %v742
    %vm744 = vcmp.eq.f32.partialorder %v672, inf
    %v745 = vsel %vm744, %v672, %v743
    %vm746 = vcmp.eq.f32.partialorder %v672, 0.0
    %v747 = vand.u32 %v672, 2147483648
    %v748 = vsel %vm746, %v747, %v745
    %v749 = vrsqrt.pop %v673
    %v750 = vmul.f32 %v673, %v749
    %vm751 = vcmp.eq.f32.partialorder %v673, inf
    %v752 = vsel %vm751, %v673, %v750
    %vm753 = vcmp.eq.f32.partialorder %v673, 0.0
    %v754 = vand.u32 %v673, 2147483648
    %v755 = vsel %vm753, %v754, %v752
    %v756 = vrsqrt.pop %v674
    %v757 = vmul.f32 %v674, %v756
    %vm758 = vcmp.eq.f32.partialorder %v674, inf
    %v759 = vsel %vm758, %v674, %v757
    %vm760 = vcmp.eq.f32.partialorder %v674, 0.0
    %v761 = vand.u32 %v674, 2147483648
    %v762 = vsel %vm760, %v761, %v759
    %v763 = vrsqrt.pop %v675
    %v764 = vmul.f32 %v675, %v763
    %vm765 = vcmp.eq.f32.partialorder %v675, inf
    %v766 = vsel %vm765, %v675, %v764
    %vm767 = vcmp.eq.f32.partialorder %v675, 0.0
    %v768 = vand.u32 %v675, 2147483648
    %v769 = vsel %vm767, %v768, %v766
    %v770 = vrsqrt.pop %v676
    %v771 = vmul.f32 %v676, %v770
    %vm772 = vcmp.eq.f32.partialorder %v676, inf
    %v773 = vsel %vm772, %v676, %v771
    %vm774 = vcmp.eq.f32.partialorder %v676, 0.0
    %v775 = vand.u32 %v676, 2147483648
    %v776 = vsel %vm774, %v775, %v773
    %v777 = vrsqrt.pop %v677
    %v778 = vmul.f32 %v677, %v777
    %vm779 = vcmp.eq.f32.partialorder %v677, inf
    %v780 = vsel %vm779, %v677, %v778
    %vm781 = vcmp.eq.f32.partialorder %v677, 0.0
    %v782 = vand.u32 %v677, 2147483648
    %v783 = vsel %vm781, %v782, %v780
    %v784 = vrsqrt.pop %v678
    %v785 = vmul.f32 %v678, %v784
    %vm786 = vcmp.eq.f32.partialorder %v678, inf
    %v787 = vsel %vm786, %v678, %v785
    %vm788 = vcmp.eq.f32.partialorder %v678, 0.0
    %v789 = vand.u32 %v678, 2147483648
    %v790 = vsel %vm788, %v789, %v787
    %v791 = vmul.f32 %v685, %v685
    %v792 = vmul.f32 %v692, %v692
    %v793 = vmul.f32 %v699, %v699
    %v794 = vmul.f32 %v706, %v706
    %v795 = vmul.f32 %v713, %v713
    %v796 = vmul.f32 %v720, %v720
    %v797 = vmul.f32 %v727, %v727
    %v798 = vmul.f32 %v734, %v734
    %v799 = vmul.f32 %v741, %v741
    %v800 = vmul.f32 %v748, %v748
    %v801 = vmul.f32 %v755, %v755
    %v802 = vmul.f32 %v762, %v762
    %v803 = vmul.f32 %v769, %v769
    %v804 = vmul.f32 %v776, %v776
    %v805 = vmul.f32 %v783, %v783
    %v806 = vmul.f32 %v790, %v790
    %v807 = vadd.f32 %v791, %v792
    %v808 = vadd.f32 %v807, %v793
    %v809 = vadd.f32 %v808, %v794
    %v810 = vadd.f32 %v809, %v795
    %v811 = vadd.f32 %v810, %v796
    %v812 = vadd.f32 %v811, %v797
    %v813 = vadd.f32 %v812, %v798
    %v814 = vadd.f32 %v813, %v799
    %v815 = vadd.f32 %v814, %v800
    %v816 = vadd.f32 %v815, %v801
    %v817 = vadd.f32 %v816, %v802
    %v818 = vadd.f32 %v817, %v803
    %v819 = vadd.f32 %v818, %v804
    %v820 = vadd.f32 %v819, %v805
    %v821 = vadd.f32 %v820, %v806
    %822 = vadd.xlane.f32.xlu0 %v821
    %v823 = vpop.xlane.xlu0 %822
    %v824 = vrot.slane %v823, 4
    %v825 = vadd.f32 %v823, %v824
    %v826 = vrot.slane %v825, 2
    %v827 = vadd.f32 %v825, %v826
    %v828 = vrot.slane %v827, 1
    %v829 = vadd.f32 %v827, %v828
    %s830 = vtos %v829
    %s831 = sadd.f32 %s830, 1e-30
    %v832 = vstv %s831
    %v833 = vrsqrt.pop %v832
    %s834 = vtos %v833
    %s835 = smul.f32 %s834, 0.5
    %v836 = vstv %s835
    %v837 = vmul.f32 %v286, %v836
    %v838 = vmul.f32 %v287, %v836
    %v839 = vmul.f32 %v288, %v836
    %v840 = vmul.f32 %v289, %v836
    %v841 = vmul.f32 %v290, %v836
    %v842 = vmul.f32 %v291, %v836
    %v843 = vmul.f32 %v292, %v836
    %v844 = vmul.f32 %v293, %v836
    %v845 = vmul.f32 %v294, %v836
    %v846 = vmul.f32 %v295, %v836
    %v847 = vmul.f32 %v296, %v836
    %v848 = vmul.f32 %v297, %v836
    %v849 = vmul.f32 %v298, %v836
    %v850 = vmul.f32 %v299, %v836
    %v851 = vmul.f32 %v300, %v836
    %v852 = vmul.f32 %v301, %v836
    %v853 = vmul.f32 %v685, %v836
    %v854 = vmul.f32 %v692, %v836
    %v855 = vmul.f32 %v699, %v836
    %v856 = vmul.f32 %v706, %v836
    %v857 = vmul.f32 %v713, %v836
    %v858 = vmul.f32 %v720, %v836
    %v859 = vmul.f32 %v727, %v836
    %v860 = vmul.f32 %v734, %v836
    %v861 = vmul.f32 %v741, %v836
    %v862 = vmul.f32 %v748, %v836
    %v863 = vmul.f32 %v755, %v836
    %v864 = vmul.f32 %v762, %v836
    %v865 = vmul.f32 %v769, %v836
    %v866 = vmul.f32 %v776, %v836
    %v867 = vmul.f32 %v783, %v836
    %v868 = vmul.f32 %v790, %v836
    %v869 = vpack.c.bf16 %v854, %v853
    %v870 = vpack.c.bf16 %v856, %v855
    %v871 = vpack.c.bf16 %v858, %v857
    %v872 = vpack.c.bf16 %v860, %v859
    %v873 = vpack.c.bf16 %v862, %v861
    %v874 = vpack.c.bf16 %v864, %v863
    %v875 = vpack.c.bf16 %v866, %v865
    %v876 = vpack.c.bf16 %v868, %v867
    %s877 = smul.f32 %s835, 0.1
    %v878 = vstv %s877
    %v879 = vmul.f32 %v878, %v382
    %v880 = vmul.f32 %v878, %v383
    %v881 = vmul.f32 %v878, %v384
    %v882 = vmul.f32 %v878, %v385
    %v883 = vmul.f32 %v878, %v386
    %v884 = vmul.f32 %v878, %v387
    %v885 = vmul.f32 %v878, %v388
    %v886 = vmul.f32 %v878, %v389
    %v887 = vmul.f32 %v878, %v390
    %v888 = vmul.f32 %v878, %v391
    %v889 = vmul.f32 %v878, %v392
    %v890 = vmul.f32 %v878, %v393
    %v891 = vmul.f32 %v878, %v394
    %v892 = vmul.f32 %v878, %v395
    %v893 = vmul.f32 %v878, %v396
    %v894 = vmul.f32 %v878, %v397
    // While loop
    $region90: #{hypernd_forward.1} parent=1 // loop_pre_header
      _
    $region91: #{hypernd_forward.1} parent=1 // loop_header
      %s896 = sphi 0, %s1746
      %v897 = vphi %v837, %v1610
      %v898 = vphi %v838, %v1611
      %v899 = vphi %v839, %v1612
      %v900 = vphi %v840, %v1613
      %v901 = vphi %v841, %v1614
      %v902 = vphi %v842, %v1615
      %v903 = vphi %v843, %v1616
      %v904 = vphi %v844, %v1617
      %v905 = vphi %v845, %v1618
      %v906 = vphi %v846, %v1619
      %v907 = vphi %v847, %v1620
      %v908 = vphi %v848, %v1621
      %v909 = vphi %v849, %v1622
      %v910 = vphi %v850, %v1623
      %v911 = vphi %v851, %v1624
      %v912 = vphi %v852, %v1625
      %v913 = vphi %v869, %v1642
      %v914 = vphi %v870, %v1643
      %v915 = vphi %v871, %v1644
      %v916 = vphi %v872, %v1645
      %v917 = vphi %v873, %v1646
      %v918 = vphi %v874, %v1647
      %v919 = vphi %v875, %v1648
      %v920 = vphi %v876, %v1649
      %s921 = sphi 1.0, %s1705
      %s922 = sphi 0.0, %s1745
      %p923 = scmp.lt.s32.totalorder %s896, 10
      %s924 = smul.f32 %s922, 1e-08
      %p925 = scmp.ge.f32.partialorder %s921, %s924
      %p926 = pnand %p923, %p925
      %p927 = pneg %p926
    $region92: #{hypernd_forward.1} parent=1 // loop_header_branch
      %929 = sbr.rel (%p926) target = $region96
    $region93: #{hypernd_forward.1} parent=1 // loop_body
      %v946 = vunpack.c.l.b16 %v270
      %v947 = vunpack.c.l.b16 %v271
      %v948 = vunpack.c.l.b16 %v272
      %v949 = vunpack.c.l.b16 %v273
      %v950 = vunpack.c.l.b16 %v274
      %v951 = vunpack.c.l.b16 %v275
      %v952 = vunpack.c.l.b16 %v276
      %v953 = vunpack.c.l.b16 %v277
      %v954 = vunpack.c.l.b16 %v278
      %v955 = vunpack.c.l.b16 %v279
      %v956 = vunpack.c.l.b16 %v280
      %v957 = vunpack.c.l.b16 %v281
      %v958 = vunpack.c.l.b16 %v282
      %v959 = vunpack.c.l.b16 %v283
      %v960 = vunpack.c.l.b16 %v284
      %v961 = vunpack.c.l.b16 %v285
      %v962 = vpack.c.b16 %v947, %v946
      %v963 = vpack.c.b16 %v949, %v948
      %v964 = vpack.c.b16 %v951, %v950
      %v965 = vpack.c.b16 %v953, %v952
      %v966 = vpack.c.b16 %v955, %v954
      %v967 = vpack.c.b16 %v957, %v956
      %v968 = vpack.c.b16 %v959, %v958
      %v969 = vpack.c.b16 %v961, %v960
      %978 = vmatprep.subr.bf16.mxu0 0
      %979 = vmatpush1.bf16.msra.mxu0 %v913
      %980 = vmatprep.subr.bf16.mxu0 0
      %981 = vmatpush1.bf16.msra.mxu0 %v914
      %982 = vmatprep.subr.bf16.mxu0 0
      %983 = vmatpush1.bf16.msra.mxu0 %v915
      %984 = vmatprep.subr.bf16.mxu0 0
      %985 = vmatpush1.bf16.msra.mxu0 %v916
      %986 = vmatprep.subr.bf16.mxu0 0
      %987 = vmatpush1.bf16.msra.mxu0 %v917
      %988 = vmatprep.subr.bf16.mxu0 0
      %989 = vmatpush1.bf16.msra.mxu0 %v918
      %990 = vmatprep.subr.bf16.mxu0 0
      %991 = vmatpush1.bf16.msra.mxu0 %v919
      %992 = vmatprep.subr.bf16.mxu0 0
      %993 = vmatpush1.bf16.msra.mxu0 %v920
      %994 = vmatprep.subr.bf16.mxu0 0
      %995 = vmatpush1.bf16.msra.mxu0 0
      %996 = vmatprep.subr.bf16.mxu0 0
      %997 = vmatpush1.bf16.msra.mxu0 0
      %998 = vmatprep.subr.bf16.mxu0 0
      %999 = vmatpush1.bf16.msra.mxu0 0
      %1000 = vmatprep.subr.bf16.mxu0 0
      %1001 = vmatpush1.bf16.msra.mxu0 0
      %1002 = vmatprep.subr.bf16.mxu0 0
      %1003 = vmatpush1.bf16.msra.mxu0 0
      %1004 = vmatprep.subr.bf16.mxu0 0
      %1005 = vmatpush1.bf16.msra.mxu0 0
      %1006 = vmatprep.subr.bf16.mxu0 0
      %1007 = vmatpush1.bf16.msra.mxu0 0
      %1008 = vmatprep.subr.bf16.mxu0 0
      %1009 = vmatpush1.bf16.msra.mxu0 0
      %1010 = vmatprep.mubr.bf16.mxu0 0
      %1011 = vmatmul.mubr.bf16.gmra.mrb[0].mxu0 %v962
      %v1012 = vpop.f32.mrb[0].mxu0
      %v1013 = vadd.f32 0.0, %v1012
      %v1014 = vpop.f32.mrb[0].mxu0
      %v1015 = vpop.f32.mrb[0].mxu0
      %v1016 = vadd.f32 0.0, %v1015
      %v1017 = vpop.f32.mrb[0].mxu0
      %1018 = vmatprep.mubr.bf16.mxu0 0
      %1019 = vmatmul.mubr.bf16.gmra.mrb[0].mxu0 %v963
      %v1020 = vpop.f32.mrb[0].mxu0
      %v1021 = vadd.f32 0.0, %v1020
      %v1022 = vpop.f32.mrb[0].mxu0
      %v1023 = vpop.f32.mrb[0].mxu0
      %v1024 = vadd.f32 0.0, %v1023
      %v1025 = vpop.f32.mrb[0].mxu0
      %1026 = vmatprep.mubr.bf16.mxu0 0
      %1027 = vmatmul.mubr.bf16.gmra.mrb[0].mxu0 %v964
      %v1028 = vpop.f32.mrb[0].mxu0
      %v1029 = vadd.f32 0.0, %v1028
      %v1030 = vpop.f32.mrb[0].mxu0
      %v1031 = vpop.f32.mrb[0].mxu0
      %v1032 = vadd.f32 0.0, %v1031
      %v1033 = vpop.f32.mrb[0].mxu0
      %1034 = vmatprep.mubr.bf16.mxu0 0
      %1035 = vmatmul.mubr.bf16.gmra.mrb[0].mxu0 %v965
      %v1036 = vpop.f32.mrb[0].mxu0
      %v1037 = vadd.f32 0.0, %v1036
      %v1038 = vpop.f32.mrb[0].mxu0
      %v1039 = vpop.f32.mrb[0].mxu0
      %v1040 = vadd.f32 0.0, %v1039
      %v1041 = vpop.f32.mrb[0].mxu0
      %1042 = vmatprep.mubr.bf16.mxu0 0
      %1043 = vmatmul.mubr.bf16.gmra.mrb[0].mxu0 %v966
      %v1044 = vpop.f32.mrb[0].mxu0
      %v1045 = vadd.f32 0.0, %v1044
      %v1046 = vpop.f32.mrb[0].mxu0
      %v1047 = vpop.f32.mrb[0].mxu0
      %v1048 = vadd.f32 0.0, %v1047
      %v1049 = vpop.f32.mrb[0].mxu0
      %1050 = vmatprep.mubr.bf16.mxu0 0
      %1051 = vmatmul.mubr.bf16.gmra.mrb[0].mxu0 %v967
      %v1052 = vpop.f32.mrb[0].mxu0
      %v1053 = vadd.f32 0.0, %v1052
      %v1054 = vpop.f32.mrb[0].mxu0
      %v1055 = vpop.f32.mrb[0].mxu0
      %v1056 = vadd.f32 0.0, %v1055
      %v1057 = vpop.f32.mrb[0].mxu0
      %1058 = vmatprep.mubr.bf16.mxu0 0
      %1059 = vmatmul.mubr.bf16.gmra.mrb[0].mxu0 %v968
      %v1060 = vpop.f32.mrb[0].mxu0
      %v1061 = vadd.f32 0.0, %v1060
      %v1062 = vpop.f32.mrb[0].mxu0
      %v1063 = vpop.f32.mrb[0].mxu0
      %v1064 = vadd.f32 0.0, %v1063
      %v1065 = vpop.f32.mrb[0].mxu0
      %1066 = vmatprep.mubr.bf16.mxu0 0
      %1067 = vmatmul.mubr.bf16.gmra.mrb[0].mxu0 %v969
      %v1068 = vpop.f32.mrb[0].mxu0
      %v1069 = vadd.f32 0.0, %v1068
      %v1070 = vpop.f32.mrb[0].mxu0
      %v1071 = vpop.f32.mrb[0].mxu0
      %v1072 = vadd.f32 0.0, %v1071
      %v1073 = vpop.f32.mrb[0].mxu0
      %1074 = vdwg.mxu0
      %v1075 = vmul.f32 %v1013, 0.9
      %v1076 = vmul.f32 %v1016, 0.9
      %v1077 = vmul.f32 %v1021, 0.9
      %v1078 = vmul.f32 %v1024, 0.9
      %v1079 = vmul.f32 %v1029, 0.9
      %v1080 = vmul.f32 %v1032, 0.9
      %v1081 = vmul.f32 %v1037, 0.9
      %v1082 = vmul.f32 %v1040, 0.9
      %v1083 = vmul.f32 %v1045, 0.9
      %v1084 = vmul.f32 %v1048, 0.9
      %v1085 = vmul.f32 %v1053, 0.9
      %v1086 = vmul.f32 %v1056, 0.9
      %v1087 = vmul.f32 %v1061, 0.9
      %v1088 = vmul.f32 %v1064, 0.9
      %v1089 = vmul.f32 %v1069, 0.9
      %v1090 = vmul.f32 %v1072, 0.9
      %1092 = vset.pattern.permute.xlu0 0
      %1093 = vperm.xlu0 %1092, %v206
      %v1094 = vpop.permute.xlu0 %1093
      %1097 = vset.pattern.permute.xlu0 0
      %1098 = vperm.xlu0 %1097, %v207
      %v1099 = vpop.permute.xlu0 %1098
      %1102 = vset.pattern.permute.xlu0 0
      %1103 = vperm.xlu0 %1102, %v208
      %v1104 = vpop.permute.xlu0 %1103
      %1107 = vset.pattern.permute.xlu0 0
      %1108 = vperm.xlu0 %1107, %v209
      %v1109 = vpop.permute.xlu0 %1108
      %1112 = vset.pattern.permute.xlu0 0
      %1113 = vperm.xlu0 %1112, %v210
      %v1114 = vpop.permute.xlu0 %1113
      %1117 = vset.pattern.permute.xlu0 0
      %1118 = vperm.xlu0 %1117, %v211
      %v1119 = vpop.permute.xlu0 %1118
      %1122 = vset.pattern.permute.xlu0 0
      %1123 = vperm.xlu0 %1122, %v212
      %v1124 = vpop.permute.xlu0 %1123
      %1127 = vset.pattern.permute.xlu0 0
      %1128 = vperm.xlu0 %1127, %v213
      %v1129 = vpop.permute.xlu0 %1128
      %1132 = vset.pattern.permute.xlu0 0
      %1133 = vperm.xlu0 %1132, %v214
      %v1134 = vpop.permute.xlu0 %1133
      %1137 = vset.pattern.permute.xlu0 0
      %1138 = vperm.xlu0 %1137, %v215
      %v1139 = vpop.permute.xlu0 %1138
      %1142 = vset.pattern.permute.xlu0 0
      %1143 = vperm.xlu0 %1142, %v216
      %v1144 = vpop.permute.xlu0 %1143
      %1147 = vset.pattern.permute.xlu0 0
      %1148 = vperm.xlu0 %1147, %v217
      %v1149 = vpop.permute.xlu0 %1148
      %1152 = vset.pattern.permute.xlu0 0
      %1153 = vperm.xlu0 %1152, %v218
      %v1154 = vpop.permute.xlu0 %1153
      %1157 = vset.pattern.permute.xlu0 0
      %1158 = vperm.xlu0 %1157, %v219
      %v1159 = vpop.permute.xlu0 %1158
      %1162 = vset.pattern.permute.xlu0 0
      %1163 = vperm.xlu0 %1162, %v220
      %v1164 = vpop.permute.xlu0 %1163
      %1167 = vset.pattern.permute.xlu0 0
      %1168 = vperm.xlu0 %1167, %v221
      %v1169 = vpop.permute.xlu0 %1168
      %v1171 = vmul.f32 %v1075, %v1094
      %v1172 = vmul.f32 %v1076, %v1099
      %v1173 = vmul.f32 %v1077, %v1104
      %v1174 = vmul.f32 %v1078, %v1109
      %v1175 = vmul.f32 %v1079, %v1114
      %v1176 = vmul.f32 %v1080, %v1119
      %v1177 = vmul.f32 %v1081, %v1124
      %v1178 = vmul.f32 %v1082, %v1129
      %v1179 = vmul.f32 %v1083, %v1134
      %v1180 = vmul.f32 %v1084, %v1139
      %v1181 = vmul.f32 %v1085, %v1144
      %v1182 = vmul.f32 %v1086, %v1149
      %v1183 = vmul.f32 %v1087, %v1154
      %v1184 = vmul.f32 %v1088, %v1159
      %v1185 = vmul.f32 %v1089, %v1164
      %v1186 = vmul.f32 %v1090, %v1169
      %v1187 = vadd.f32 %v1171, %v879
      %v1188 = vadd.f32 %v1172, %v880
      %v1189 = vadd.f32 %v1173, %v881
      %v1190 = vadd.f32 %v1174, %v882
      %v1191 = vadd.f32 %v1175, %v883
      %v1192 = vadd.f32 %v1176, %v884
      %v1193 = vadd.f32 %v1177, %v885
      %v1194 = vadd.f32 %v1178, %v886
      %v1195 = vadd.f32 %v1179, %v887
      %v1196 = vadd.f32 %v1180, %v888
      %v1197 = vadd.f32 %v1181, %v889
      %v1198 = vadd.f32 %v1182, %v890
      %v1199 = vadd.f32 %v1183, %v891
      %v1200 = vadd.f32 %v1184, %v892
      %v1201 = vadd.f32 %v1185, %v893
      %v1202 = vadd.f32 %v1186, %v894
      %v1203 = vmul.f32 %v1187, %v1187
      %v1204 = vmul.f32 %v1188, %v1188
      %v1205 = vmul.f32 %v1189, %v1189
      %v1206 = vmul.f32 %v1190, %v1190
      %v1207 = vmul.f32 %v1191, %v1191
      %v1208 = vmul.f32 %v1192, %v1192
      %v1209 = vmul.f32 %v1193, %v1193
      %v1210 = vmul.f32 %v1194, %v1194
      %v1211 = vmul.f32 %v1195, %v1195
      %v1212 = vmul.f32 %v1196, %v1196
      %v1213 = vmul.f32 %v1197, %v1197
      %v1214 = vmul.f32 %v1198, %v1198
      %v1215 = vmul.f32 %v1199, %v1199
      %v1216 = vmul.f32 %v1200, %v1200
      %v1217 = vmul.f32 %v1201, %v1201
      %v1218 = vmul.f32 %v1202, %v1202
      %v1219 = vpack.c.bf16 %v1204, %v1203
      %v1220 = vpack.c.bf16 %v1206, %v1205
      %v1221 = vpack.c.bf16 %v1208, %v1207
      %v1222 = vpack.c.bf16 %v1210, %v1209
      %v1223 = vpack.c.bf16 %v1212, %v1211
      %v1224 = vpack.c.bf16 %v1214, %v1213
      %v1225 = vpack.c.bf16 %v1216, %v1215
      %v1226 = vpack.c.bf16 %v1218, %v1217
      %1227 = vmatprep.subr.bf16.mxu0 0
      %1228 = vmatpush1.bf16.msra.mxu0 %v1219
      %1229 = vmatprep.subr.bf16.mxu0 0
      %1230 = vmatpush1.bf16.msra.mxu0 %v1220
      %1231 = vmatprep.subr.bf16.mxu0 0
      %1232 = vmatpush1.bf16.msra.mxu0 %v1221
      %1233 = vmatprep.subr.bf16.mxu0 0
      %1234 = vmatpush1.bf16.msra.mxu0 %v1222
      %1235 = vmatprep.subr.bf16.mxu0 0
      %1236 = vmatpush1.bf16.msra.mxu0 %v1223
      %1237 = vmatprep.subr.bf16.mxu0 0
      %1238 = vmatpush1.bf16.msra.mxu0 %v1224
      %1239 = vmatprep.subr.bf16.mxu0 0
      %1240 = vmatpush1.bf16.msra.mxu0 %v1225
      %1241 = vmatprep.subr.bf16.mxu0 0
      %1242 = vmatpush1.bf16.msra.mxu0 %v1226
      %1243 = vmatprep.subr.bf16.mxu0 0
      %1244 = vmatpush1.bf16.msra.mxu0 0
      %1245 = vmatprep.subr.bf16.mxu0 0
      %1246 = vmatpush1.bf16.msra.mxu0 0
      %1247 = vmatprep.subr.bf16.mxu0 0
      %1248 = vmatpush1.bf16.msra.mxu0 0
      %1249 = vmatprep.subr.bf16.mxu0 0
      %1250 = vmatpush1.bf16.msra.mxu0 0
      %1251 = vmatprep.subr.bf16.mxu0 0
      %1252 = vmatpush1.bf16.msra.mxu0 0
      %1253 = vmatprep.subr.bf16.mxu0 0
      %1254 = vmatpush1.bf16.msra.mxu0 0
      %1255 = vmatprep.subr.bf16.mxu0 0
      %1256 = vmatpush1.bf16.msra.mxu0 0
      %1257 = vmatprep.subr.bf16.mxu0 0
      %1258 = vmatpush1.bf16.msra.mxu0 0
      %1259 = vmatprep.mubr.bf16.mxu0 0
      %1260 = vmatmul.mubr.bf16.gmra.mrb[0].mxu0 %v454
      %v1261 = vpop.f32.mrb[0].mxu0
      %v1262 = vadd.f32 0.0, %v1261
      %v1263 = vpop.f32.mrb[0].mxu0
      %v1264 = vpop.f32.mrb[0].mxu0
      %v1265 = vadd.f32 0.0, %v1264
      %v1266 = vpop.f32.mrb[0].mxu0
      %1267 = vmatprep.mubr.bf16.mxu0 0
      %1268 = vmatmul.mubr.bf16.gmra.mrb[0].mxu0 %v455
      %v1269 = vpop.f32.mrb[0].mxu0
      %v1270 = vadd.f32 0.0, %v1269
      %v1271 = vpop.f32.mrb[0].mxu0
      %v1272 = vpop.f32.mrb[0].mxu0
      %v1273 = vadd.f32 0.0, %v1272
      %v1274 = vpop.f32.mrb[0].mxu0
      %1275 = vmatprep.mubr.bf16.mxu0 0
      %1276 = vmatmul.mubr.bf16.gmra.mrb[0].mxu0 %v456
      %v1277 = vpop.f32.mrb[0].mxu0
      %v1278 = vadd.f32 0.0, %v1277
      %v1279 = vpop.f32.mrb[0].mxu0
      %v1280 = vpop.f32.mrb[0].mxu0
      %v1281 = vadd.f32 0.0, %v1280
      %v1282 = vpop.f32.mrb[0].mxu0
      %1283 = vmatprep.mubr.bf16.mxu0 0
      %1284 = vmatmul.mubr.bf16.gmra.mrb[0].mxu0 %v457
      %v1285 = vpop.f32.mrb[0].mxu0
      %v1286 = vadd.f32 0.0, %v1285
      %v1287 = vpop.f32.mrb[0].mxu0
      %v1288 = vpop.f32.mrb[0].mxu0
      %v1289 = vadd.f32 0.0, %v1288
      %v1290 = vpop.f32.mrb[0].mxu0
      %1291 = vmatprep.mubr.bf16.mxu0 0
      %1292 = vmatmul.mubr.bf16.gmra.mrb[0].mxu0 %v458
      %v1293 = vpop.f32.mrb[0].mxu0
      %v1294 = vadd.f32 0.0, %v1293
      %v1295 = vpop.f32.mrb[0].mxu0
      %v1296 = vpop.f32.mrb[0].mxu0
      %v1297 = vadd.f32 0.0, %v1296
      %v1298 = vpop.f32.mrb[0].mxu0
      %1299 = vmatprep.mubr.bf16.mxu0 0
      %1300 = vmatmul.mubr.bf16.gmra.mrb[0].mxu0 %v459
      %v1301 = vpop.f32.mrb[0].mxu0
      %v1302 = vadd.f32 0.0, %v1301
      %v1303 = vpop.f32.mrb[0].mxu0
      %v1304 = vpop.f32.mrb[0].mxu0
      %v1305 = vadd.f32 0.0, %v1304
      %v1306 = vpop.f32.mrb[0].mxu0
      %1307 = vmatprep.mubr.bf16.mxu0 0
      %1308 = vmatmul.mubr.bf16.gmra.mrb[0].mxu0 %v460
      %v1309 = vpop.f32.mrb[0].mxu0
      %v1310 = vadd.f32 0.0, %v1309
      %v1311 = vpop.f32.mrb[0].mxu0
      %v1312 = vpop.f32.mrb[0].mxu0
      %v1313 = vadd.f32 0.0, %v1312
      %v1314 = vpop.f32.mrb[0].mxu0
      %1315 = vmatprep.mubr.bf16.mxu0 0
      %1316 = vmatmul.mubr.bf16.gmra.mrb[0].mxu0 %v461
      %v1317 = vpop.f32.mrb[0].mxu0
      %v1318 = vadd.f32 0.0, %v1317
      %v1319 = vpop.f32.mrb[0].mxu0
      %v1320 = vpop.f32.mrb[0].mxu0
      %v1321 = vadd.f32 0.0, %v1320
      %v1322 = vpop.f32.mrb[0].mxu0
      %1323 = vdwg.mxu0
      %v1324 = vmax.f32 %v1262, 0.0
      %v1325 = vmax.f32 %v1265, 0.0
      %v1326 = vmax.f32 %v1270, 0.0
      %v1327 = vmax.f32 %v1273, 0.0
      %v1328 = vmax.f32 %v1278, 0.0
      %v1329 = vmax.f32 %v1281, 0.0
      %v1330 = vmax.f32 %v1286, 0.0
      %v1331 = vmax.f32 %v1289, 0.0
      %v1332 = vmax.f32 %v1294, 0.0
      %v1333 = vmax.f32 %v1297, 0.0
      %v1334 = vmax.f32 %v1302, 0.0
      %v1335 = vmax.f32 %v1305, 0.0
      %v1336 = vmax.f32 %v1310, 0.0
      %v1337 = vmax.f32 %v1313, 0.0
      %v1338 = vmax.f32 %v1318, 0.0
      %v1339 = vmax.f32 %v1321, 0.0
      %v1340 = vmul.f32 %v1324, %v586
      %v1341 = vmul.f32 %v1325, %v591
      %v1342 = vmul.f32 %v1326, %v596
      %v1343 = vmul.f32 %v1327, %v601
      %v1344 = vmul.f32 %v1328, %v606
      %v1345 = vmul.f32 %v1329, %v611
      %v1346 = vmul.f32 %v1330, %v616
      %v1347 = vmul.f32 %v1331, %v621
      %v1348 = vmul.f32 %v1332, %v626
      %v1349 = vmul.f32 %v1333, %v631
      %v1350 = vmul.f32 %v1334, %v636
      %v1351 = vmul.f32 %v1335, %v641
      %v1352 = vmul.f32 %v1336, %v646
      %v1353 = vmul.f32 %v1337, %v651
      %v1354 = vmul.f32 %v1338, %v656
      %v1355 = vmul.f32 %v1339, %v661
      %v1356 = vrsqrt.pop %v1340
      %v1357 = vmul.f32 %v1340, %v1356
      %vm1358 = vcmp.eq.f32.partialorder %v1340, inf
      %v1359 = vsel %vm1358, %v1340, %v1357
      %vm1360 = vcmp.eq.f32.partialorder %v1340, 0.0
      %v1361 = vand.u32 %v1340, 2147483648
      %v1362 = vsel %vm1360, %v1361, %v1359
      %v1363 = vrsqrt.pop %v1341
      %v1364 = vmul.f32 %v1341, %v1363
      %vm1365 = vcmp.eq.f32.partialorder %v1341, inf
      %v1366 = vsel %vm1365, %v1341, %v1364
      %vm1367 = vcmp.eq.f32.partialorder %v1341, 0.0
      %v1368 = vand.u32 %v1341, 2147483648
      %v1369 = vsel %vm1367, %v1368, %v1366
      %v1370 = vrsqrt.pop %v1342
      %v1371 = vmul.f32 %v1342, %v1370
      %vm1372 = vcmp.eq.f32.partialorder %v1342, inf
      %v1373 = vsel %vm1372, %v1342, %v1371
      %vm1374 = vcmp.eq.f32.partialorder %v1342, 0.0
      %v1375 = vand.u32 %v1342, 2147483648
      %v1376 = vsel %vm1374, %v1375, %v1373
      %v1377 = vrsqrt.pop %v1343
      %v1378 = vmul.f32 %v1343, %v1377
      %vm1379 = vcmp.eq.f32.partialorder %v1343, inf
      %v1380 = vsel %vm1379, %v1343, %v1378
      %vm1381 = vcmp.eq.f32.partialorder %v1343, 0.0
      %v1382 = vand.u32 %v1343, 2147483648
      %v1383 = vsel %vm1381, %v1382, %v1380
      %v1384 = vrsqrt.pop %v1344
      %v1385 = vmul.f32 %v1344, %v1384
      %vm1386 = vcmp.eq.f32.partialorder %v1344, inf
      %v1387 = vsel %vm1386, %v1344, %v1385
      %vm1388 = vcmp.eq.f32.partialorder %v1344, 0.0
      %v1389 = vand.u32 %v1344, 2147483648
      %v1390 = vsel %vm1388, %v1389, %v1387
      %v1391 = vrsqrt.pop %v1345
      %v1392 = vmul.f32 %v1345, %v1391
      %vm1393 = vcmp.eq.f32.partialorder %v1345, inf
      %v1394 = vsel %vm1393, %v1345, %v1392
      %vm1395 = vcmp.eq.f32.partialorder %v1345, 0.0
      %v1396 = vand.u32 %v1345, 2147483648
      %v1397 = vsel %vm1395, %v1396, %v1394
      %v1398 = vrsqrt.pop %v1346
      %v1399 = vmul.f32 %v1346, %v1398
      %vm1400 = vcmp.eq.f32.partialorder %v1346, inf
      %v1401 = vsel %vm1400, %v1346, %v1399
      %vm1402 = vcmp.eq.f32.partialorder %v1346, 0.0
      %v1403 = vand.u32 %v1346, 2147483648
      %v1404 = vsel %vm1402, %v1403, %v1401
      %v1405 = vrsqrt.pop %v1347
      %v1406 = vmul.f32 %v1347, %v1405
      %vm1407 = vcmp.eq.f32.partialorder %v1347, inf
      %v1408 = vsel %vm1407, %v1347, %v1406
      %vm1409 = vcmp.eq.f32.partialorder %v1347, 0.0
      %v1410 = vand.u32 %v1347, 2147483648
      %v1411 = vsel %vm1409, %v1410, %v1408
      %v1412 = vrsqrt.pop %v1348
      %v1413 = vmul.f32 %v1348, %v1412
      %vm1414 = vcmp.eq.f32.partialorder %v1348, inf
      %v1415 = vsel %vm1414, %v1348, %v1413
      %vm1416 = vcmp.eq.f32.partialorder %v1348, 0.0
      %v1417 = vand.u32 %v1348, 2147483648
      %v1418 = vsel %vm1416, %v1417, %v1415
      %v1419 = vrsqrt.pop %v1349
      %v1420 = vmul.f32 %v1349, %v1419
      %vm1421 = vcmp.eq.f32.partialorder %v1349, inf
      %v1422 = vsel %vm1421, %v1349, %v1420
      %vm1423 = vcmp.eq.f32.partialorder %v1349, 0.0
      %v1424 = vand.u32 %v1349, 2147483648
      %v1425 = vsel %vm1423, %v1424, %v1422
      %v1426 = vrsqrt.pop %v1350
      %v1427 = vmul.f32 %v1350, %v1426
      %vm1428 = vcmp.eq.f32.partialorder %v1350, inf
      %v1429 = vsel %vm1428, %v1350, %v1427
      %vm1430 = vcmp.eq.f32.partialorder %v1350, 0.0
      %v1431 = vand.u32 %v1350, 2147483648
      %v1432 = vsel %vm1430, %v1431, %v1429
      %v1433 = vrsqrt.pop %v1351
      %v1434 = vmul.f32 %v1351, %v1433
      %vm1435 = vcmp.eq.f32.partialorder %v1351, inf
      %v1436 = vsel %vm1435, %v1351, %v1434
      %vm1437 = vcmp.eq.f32.partialorder %v1351, 0.0
      %v1438 = vand.u32 %v1351, 2147483648
      %v1439 = vsel %vm1437, %v1438, %v1436
      %v1440 = vrsqrt.pop %v1352
      %v1441 = vmul.f32 %v1352, %v1440
      %vm1442 = vcmp.eq.f32.partialorder %v1352, inf
      %v1443 = vsel %vm1442, %v1352, %v1441
      %vm1444 = vcmp.eq.f32.partialorder %v1352, 0.0
      %v1445 = vand.u32 %v1352, 2147483648
      %v1446 = vsel %vm1444, %v1445, %v1443
      %v1447 = vrsqrt.pop %v1353
      %v1448 = vmul.f32 %v1353, %v1447
      %vm1449 = vcmp.eq.f32.partialorder %v1353, inf
      %v1450 = vsel %vm1449, %v1353, %v1448
      %vm1451 = vcmp.eq.f32.partialorder %v1353, 0.0
      %v1452 = vand.u32 %v1353, 2147483648
      %v1453 = vsel %vm1451, %v1452, %v1450
      %v1454 = vrsqrt.pop %v1354
      %v1455 = vmul.f32 %v1354, %v1454
      %vm1456 = vcmp.eq.f32.partialorder %v1354, inf
      %v1457 = vsel %vm1456, %v1354, %v1455
      %vm1458 = vcmp.eq.f32.partialorder %v1354, 0.0
      %v1459 = vand.u32 %v1354, 2147483648
      %v1460 = vsel %vm1458, %v1459, %v1457
      %v1461 = vrsqrt.pop %v1355
      %v1462 = vmul.f32 %v1355, %v1461
      %vm1463 = vcmp.eq.f32.partialorder %v1355, inf
      %v1464 = vsel %vm1463, %v1355, %v1462
      %vm1465 = vcmp.eq.f32.partialorder %v1355, 0.0
      %v1466 = vand.u32 %v1355, 2147483648
      %v1467 = vsel %vm1465, %v1466, %v1464
      %v1468 = vmul.f32 %v1362, %v1362
      %v1469 = vmul.f32 %v1369, %v1369
      %v1470 = vmul.f32 %v1376, %v1376
      %v1471 = vmul.f32 %v1383, %v1383
      %v1472 = vmul.f32 %v1390, %v1390
      %v1473 = vmul.f32 %v1397, %v1397
      %v1474 = vmul.f32 %v1404, %v1404
      %v1475 = vmul.f32 %v1411, %v1411
      %v1476 = vmul.f32 %v1418, %v1418
      %v1477 = vmul.f32 %v1425, %v1425
      %v1478 = vmul.f32 %v1432, %v1432
      %v1479 = vmul.f32 %v1439, %v1439
      %v1480 = vmul.f32 %v1446, %v1446
      %v1481 = vmul.f32 %v1453, %v1453
      %v1482 = vmul.f32 %v1460, %v1460
      %v1483 = vmul.f32 %v1467, %v1467
      %v1484 = vadd.f32 %v1468, %v1469
      %v1485 = vadd.f32 %v1484, %v1470
      %v1486 = vadd.f32 %v1485, %v1471
      %v1487 = vadd.f32 %v1486, %v1472
      %v1488 = vadd.f32 %v1487, %v1473
      %v1489 = vadd.f32 %v1488, %v1474
      %v1490 = vadd.f32 %v1489, %v1475
      %v1491 = vadd.f32 %v1490, %v1476
      %v1492 = vadd.f32 %v1491, %v1477
      %v1493 = vadd.f32 %v1492, %v1478
      %v1494 = vadd.f32 %v1493, %v1479
      %v1495 = vadd.f32 %v1494, %v1480
      %v1496 = vadd.f32 %v1495, %v1481
      %v1497 = vadd.f32 %v1496, %v1482
      %v1498 = vadd.f32 %v1497, %v1483
      %1499 = vadd.xlane.f32.xlu0 %v1498
      %v1500 = vpop.xlane.xlu0 %1499
      %v1501 = vrot.slane %v1500, 4
      %v1502 = vadd.f32 %v1500, %v1501
      %v1503 = vrot.slane %v1502, 2
      %v1504 = vadd.f32 %v1502, %v1503
      %v1505 = vrot.slane %v1504, 1
      %v1506 = vadd.f32 %v1504, %v1505
      %s1507 = vtos %v1506
      %s1508 = sadd.f32 %s1507, 1e-30
      %v1509 = vstv %s1508
      %v1510 = vrsqrt.pop %v1509
      %s1511 = vtos %v1510
      %s1512 = smul.f32 %s1511, 0.5
      %v1513 = vstv %s1512
      %v1514 = vmul.f32 %v222, %v1513
      %v1515 = vmul.f32 %v223, %v1513
      %v1516 = vmul.f32 %v224, %v1513
      %v1517 = vmul.f32 %v225, %v1513
      %v1518 = vmul.f32 %v226, %v1513
      %v1519 = vmul.f32 %v227, %v1513
      %v1520 = vmul.f32 %v228, %v1513
      %v1521 = vmul.f32 %v229, %v1513
      %v1522 = vmul.f32 %v230, %v1513
      %v1523 = vmul.f32 %v231, %v1513
      %v1524 = vmul.f32 %v232, %v1513
      %v1525 = vmul.f32 %v233, %v1513
      %v1526 = vmul.f32 %v234, %v1513
      %v1527 = vmul.f32 %v235, %v1513
      %v1528 = vmul.f32 %v236, %v1513
      %v1529 = vmul.f32 %v237, %v1513
      %1531 = vset.pattern.permute.xlu0 0
      %1532 = vperm.xlu0 %1531, %v1514
      %v1533 = vpop.permute.xlu0 %1532
      %1536 = vset.pattern.permute.xlu0 0
      %1537 = vperm.xlu0 %1536, %v1515
      %v1538 = vpop.permute.xlu0 %1537
      %1541 = vset.pattern.permute.xlu0 0
      %1542 = vperm.xlu0 %1541, %v1516
      %v1543 = vpop.permute.xlu0 %1542
      %1546 = vset.pattern.permute.xlu0 0
      %1547 = vperm.xlu0 %1546, %v1517
      %v1548 = vpop.permute.xlu0 %1547
      %1551 = vset.pattern.permute.xlu0 0
      %1552 = vperm.xlu0 %1551, %v1518
      %v1553 = vpop.permute.xlu0 %1552
      %1556 = vset.pattern.permute.xlu0 0
      %1557 = vperm.xlu0 %1556, %v1519
      %v1558 = vpop.permute.xlu0 %1557
      %1561 = vset.pattern.permute.xlu0 0
      %1562 = vperm.xlu0 %1561, %v1520
      %v1563 = vpop.permute.xlu0 %1562
      %1566 = vset.pattern.permute.xlu0 0
      %1567 = vperm.xlu0 %1566, %v1521
      %v1568 = vpop.permute.xlu0 %1567
      %1571 = vset.pattern.permute.xlu0 0
      %1572 = vperm.xlu0 %1571, %v1522
      %v1573 = vpop.permute.xlu0 %1572
      %1576 = vset.pattern.permute.xlu0 0
      %1577 = vperm.xlu0 %1576, %v1523
      %v1578 = vpop.permute.xlu0 %1577
      %1581 = vset.pattern.permute.xlu0 0
      %1582 = vperm.xlu0 %1581, %v1524
      %v1583 = vpop.permute.xlu0 %1582
      %1586 = vset.pattern.permute.xlu0 0
      %1587 = vperm.xlu0 %1586, %v1525
      %v1588 = vpop.permute.xlu0 %1587
      %1591 = vset.pattern.permute.xlu0 0
      %1592 = vperm.xlu0 %1591, %v1526
      %v1593 = vpop.permute.xlu0 %1592
      %1596 = vset.pattern.permute.xlu0 0
      %1597 = vperm.xlu0 %1596, %v1527
      %v1598 = vpop.permute.xlu0 %1597
      %1601 = vset.pattern.permute.xlu0 0
      %1602 = vperm.xlu0 %1601, %v1528
      %v1603 = vpop.permute.xlu0 %1602
      %1606 = vset.pattern.permute.xlu0 0
      %1607 = vperm.xlu0 %1606, %v1529
      %v1608 = vpop.permute.xlu0 %1607
      %v1610 = vmul.f32 %v1187, %v1533
      %v1611 = vmul.f32 %v1188, %v1538
      %v1612 = vmul.f32 %v1189, %v1543
      %v1613 = vmul.f32 %v1190, %v1548
      %v1614 = vmul.f32 %v1191, %v1553
      %v1615 = vmul.f32 %v1192, %v1558
      %v1616 = vmul.f32 %v1193, %v1563
      %v1617 = vmul.f32 %v1194, %v1568
      %v1618 = vmul.f32 %v1195, %v1573
      %v1619 = vmul.f32 %v1196, %v1578
      %v1620 = vmul.f32 %v1197, %v1583
      %v1621 = vmul.f32 %v1198, %v1588
      %v1622 = vmul.f32 %v1199, %v1593
      %v1623 = vmul.f32 %v1200, %v1598
      %v1624 = vmul.f32 %v1201, %v1603
      %v1625 = vmul.f32 %v1202, %v1608
      %v1626 = vmul.f32 %v1362, %v1513
      %v1627 = vmul.f32 %v1369, %v1513
      %v1628 = vmul.f32 %v1376, %v1513
      %v1629 = vmul.f32 %v1383, %v1513
      %v1630 = vmul.f32 %v1390, %v1513
      %v1631 = vmul.f32 %v1397, %v1513
      %v1632 = vmul.f32 %v1404, %v1513
      %v1633 = vmul.f32 %v1411, %v1513
      %v1634 = vmul.f32 %v1418, %v1513
      %v1635 = vmul.f32 %v1425, %v1513
      %v1636 = vmul.f32 %v1432, %v1513
      %v1637 = vmul.f32 %v1439, %v1513
      %v1638 = vmul.f32 %v1446, %v1513
      %v1639 = vmul.f32 %v1453, %v1513
      %v1640 = vmul.f32 %v1460, %v1513
      %v1641 = vmul.f32 %v1467, %v1513
      %v1642 = vpack.c.bf16 %v1627, %v1626
      %v1643 = vpack.c.bf16 %v1629, %v1628
      %v1644 = vpack.c.bf16 %v1631, %v1630
      %v1645 = vpack.c.bf16 %v1633, %v1632
      %v1646 = vpack.c.bf16 %v1635, %v1634
      %v1647 = vpack.c.bf16 %v1637, %v1636
      %v1648 = vpack.c.bf16 %v1639, %v1638
      %v1649 = vpack.c.bf16 %v1641, %v1640
      %v1650 = vsub.f32 %v1610, %v897
      %v1651 = vsub.f32 %v1611, %v898
      %v1652 = vsub.f32 %v1612, %v899
      %v1653 = vsub.f32 %v1613, %v900
      %v1654 = vsub.f32 %v1614, %v901
      %v1655 = vsub.f32 %v1615, %v902
      %v1656 = vsub.f32 %v1616, %v903
      %v1657 = vsub.f32 %v1617, %v904
      %v1658 = vsub.f32 %v1618, %v905
      %v1659 = vsub.f32 %v1619, %v906
      %v1660 = vsub.f32 %v1620, %v907
      %v1661 = vsub.f32 %v1621, %v908
      %v1662 = vsub.f32 %v1622, %v909
      %v1663 = vsub.f32 %v1623, %v910
      %v1664 = vsub.f32 %v1624, %v911
      %v1665 = vsub.f32 %v1625, %v912
      %v1666 = vmul.f32 %v1650, %v1650
      %v1667 = vmul.f32 %v1651, %v1651
      %v1668 = vmul.f32 %v1652, %v1652
      %v1669 = vmul.f32 %v1653, %v1653
      %v1670 = vmul.f32 %v1654, %v1654
      %v1671 = vmul.f32 %v1655, %v1655
      %v1672 = vmul.f32 %v1656, %v1656
      %v1673 = vmul.f32 %v1657, %v1657
      %v1674 = vmul.f32 %v1658, %v1658
      %v1675 = vmul.f32 %v1659, %v1659
      %v1676 = vmul.f32 %v1660, %v1660
      %v1677 = vmul.f32 %v1661, %v1661
      %v1678 = vmul.f32 %v1662, %v1662
      %v1679 = vmul.f32 %v1663, %v1663
      %v1680 = vmul.f32 %v1664, %v1664
      %v1681 = vmul.f32 %v1665, %v1665
      %v1682 = vadd.f32 %v1666, %v1667
      %v1683 = vadd.f32 %v1682, %v1668
      %v1684 = vadd.f32 %v1683, %v1669
      %v1685 = vadd.f32 %v1684, %v1670
      %v1686 = vadd.f32 %v1685, %v1671
      %v1687 = vadd.f32 %v1686, %v1672
      %v1688 = vadd.f32 %v1687, %v1673
      %v1689 = vadd.f32 %v1688, %v1674
      %v1690 = vadd.f32 %v1689, %v1675
      %v1691 = vadd.f32 %v1690, %v1676
      %v1692 = vadd.f32 %v1691, %v1677
      %v1693 = vadd.f32 %v1692, %v1678
      %v1694 = vadd.f32 %v1693, %v1679
      %v1695 = vadd.f32 %v1694, %v1680
      %v1696 = vadd.f32 %v1695, %v1681
      %1697 = vadd.xlane.f32.xlu0 %v1696
      %v1698 = vpop.xlane.xlu0 %1697
      %v1699 = vrot.slane %v1698, 4
      %v1700 = vadd.f32 %v1698, %v1699
      %v1701 = vrot.slane %v1700, 2
      %v1702 = vadd.f32 %v1700, %v1701
      %v1703 = vrot.slane %v1702, 1
      %v1704 = vadd.f32 %v1702, %v1703
      %s1705 = vtos %v1704
      %v1706 = vmul.f32 %v1610, %v1610
      %v1707 = vmul.f32 %v1611, %v1611
      %v1708 = vmul.f32 %v1612, %v1612
      %v1709 = vmul.f32 %v1613, %v1613
      %v1710 = vmul.f32 %v1614, %v1614
      %v1711 = vmul.f32 %v1615, %v1615
      %v1712 = vmul.f32 %v1616, %v1616
      %v1713 = vmul.f32 %v1617, %v1617
      %v1714 = vmul.f32 %v1618, %v1618
      %v1715 = vmul.f32 %v1619, %v1619
      %v1716 = vmul.f32 %v1620, %v1620
      %v1717 = vmul.f32 %v1621, %v1621
      %v1718 = vmul.f32 %v1622, %v1622
      %v1719 = vmul.f32 %v1623, %v1623
      %v1720 = vmul.f32 %v1624, %v1624
      %v1721 = vmul.f32 %v1625, %v1625
      %v1722 = vadd.f32 %v1706, %v1707
      %v1723 = vadd.f32 %v1722, %v1708
      %v1724 = vadd.f32 %v1723, %v1709
      %v1725 = vadd.f32 %v1724, %v1710
      %v1726 = vadd.f32 %v1725, %v1711
      %v1727 = vadd.f32 %v1726, %v1712
      %v1728 = vadd.f32 %v1727, %v1713
      %v1729 = vadd.f32 %v1728, %v1714
      %v1730 = vadd.f32 %v1729, %v1715
      %v1731 = vadd.f32 %v1730, %v1716
      %v1732 = vadd.f32 %v1731, %v1717
      %v1733 = vadd.f32 %v1732, %v1718
      %v1734 = vadd.f32 %v1733, %v1719
      %v1735 = vadd.f32 %v1734, %v1720
      %v1736 = vadd.f32 %v1735, %v1721
      %1737 = vadd.xlane.f32.xlu0 %v1736
      %v1738 = vpop.xlane.xlu0 %1737
      %v1739 = vrot.slane %v1738, 4
      %v1740 = vadd.f32 %v1738, %v1739
      %v1741 = vrot.slane %v1740, 2
      %v1742 = vadd.f32 %v1740, %v1741
      %v1743 = vrot.slane %v1742, 1
      %v1744 = vadd.f32 %v1742, %v1743
      %s1745 = vtos %v1744
      %s1746 = sadd.s32 %s896, 1
    $region94: #{hypernd_forward.1} parent=1 // loop_footer
      _
    $region95: #{hypernd_forward.1} parent=1 // loop_footer_branch
      %895 = sbr.rel target = $region91
    $region96: #{hypernd_forward.1} parent=1 // loop_exit
      _
    %v1747 = vstv %s921
    %v1748 = vrsqrt.pop %v1747
    %v1749 = vmul.f32 %v1747, %v1748
    %vm1750 = vcmp.eq.f32.partialorder %v1747, inf
    %v1751 = vsel %vm1750, %v1747, %v1749
    %vm1752 = vcmp.eq.f32.partialorder %v1747, 0.0
    %v1753 = vand.u32 %v1747, 2147483648
    %v1754 = vsel %vm1752, %v1753, %v1751
    %s1755 = vtos %v1754
    %s1756 = sadd.f32 %s922, 1e-30
    %v1757 = vstv %s1756
    %v1758 = vrsqrt.pop %v1757
    %s1759 = vtos %v1758
    %s1760 = smul.f32 %s1755, %s1759
    %s1761 = scalar_lea.smem [#allocation22], 0
    %1762 = sst [smem:[%s1761]] %s1760
    %s1763 = scalar_lea.smem [#allocation23], 0
    %1764 = sst [smem:[%s1763]] %s896
    %v1765 = vpack.c.bf16 %v898, %v897
    %v1766 = vpack.c.bf16 %v900, %v899
    %v1767 = vpack.c.bf16 %v902, %v901
    %v1768 = vpack.c.bf16 %v904, %v903
    %v1769 = vpack.c.bf16 %v906, %v905
    %v1770 = vpack.c.bf16 %v908, %v907
    %v1771 = vpack.c.bf16 %v910, %v909
    %v1772 = vpack.c.bf16 %v912, %v911
    %v1773 = vld [vmem:[#allocation15] sm:$0xf]
    %v1774 = vld [vmem:[#allocation15 + $0x4] sm:$0xf]
    %v1775 = vld [vmem:[#allocation15 + $0x8] sm:$0xf]
    %v1776 = vld [vmem:[#allocation15 + $0xc] sm:$0xf]
    %v1777 = vld [vmem:[#allocation15 + $0x10] sm:$0xf]
    %v1778 = vld [vmem:[#allocation15 + $0x14] sm:$0xf]
    %v1779 = vld [vmem:[#allocation15 + $0x18] sm:$0xf]
    %v1780 = vld [vmem:[#allocation15 + $0x1c] sm:$0xf]
    %v1781 = vld [vmem:[#allocation15 + $0x20] sm:$0xf]
    %v1782 = vld [vmem:[#allocation15 + $0x24] sm:$0xf]
    %v1783 = vld [vmem:[#allocation15 + $0x28] sm:$0xf]
    %v1784 = vld [vmem:[#allocation15 + $0x2c] sm:$0xf]
    %v1785 = vld [vmem:[#allocation15 + $0x30] sm:$0xf]
    %v1786 = vld [vmem:[#allocation15 + $0x34] sm:$0xf]
    %v1787 = vld [vmem:[#allocation15 + $0x38] sm:$0xf]
    %v1788 = vld [vmem:[#allocation15 + $0x3c] sm:$0xf]
    %v1789 = vld [vmem:[#allocation17] sm:$0x1]
    %v1791 = vlaneseq
    %v1792 = vshrl.u32 %v1791, 7
    %v1793 = vsub.s32 0, %v1792
    %v1794 = vrot.slane %v1789, %v1793
    %v1812 = vunpack.c.l.b16 %v1773
    %v1813 = vunpack.c.l.b16 %v1774
    %v1814 = vunpack.c.l.b16 %v1775
    %v1815 = vunpack.c.l.b16 %v1776
    %v1816 = vunpack.c.l.b16 %v1777
    %v1817 = vunpack.c.l.b16 %v1778
    %v1818 = vunpack.c.l.b16 %v1779
    %v1819 = vunpack.c.l.b16 %v1780
    %v1820 = vunpack.c.l.b16 %v1781
    %v1821 = vunpack.c.l.b16 %v1782
    %v1822 = vunpack.c.l.b16 %v1783
    %v1823 = vunpack.c.l.b16 %v1784
    %v1824 = vunpack.c.l.b16 %v1785
    %v1825 = vunpack.c.l.b16 %v1786
    %v1826 = vunpack.c.l.b16 %v1787
    %v1827 = vunpack.c.l.b16 %v1788
    %v1828 = vpack.c.b16 %v1813, %v1812
    %v1829 = vpack.c.b16 %v1815, %v1814
    %v1830 = vpack.c.b16 %v1817, %v1816
    %v1831 = vpack.c.b16 %v1819, %v1818
    %v1832 = vpack.c.b16 %v1821, %v1820
    %v1833 = vpack.c.b16 %v1823, %v1822
    %v1834 = vpack.c.b16 %v1825, %v1824
    %v1835 = vpack.c.b16 %v1827, %v1826
    %1844 = vmatprep.subr.bf16.mxu0 0
    %1845 = vmatpush1.bf16.msra.mxu0 %v1828
    %1846 = vmatprep.subr.bf16.mxu0 0
    %1847 = vmatpush1.bf16.msra.mxu0 %v1829
    %1848 = vmatprep.subr.bf16.mxu0 0
    %1849 = vmatpush1.bf16.msra.mxu0 %v1830
    %1850 = vmatprep.subr.bf16.mxu0 0
    %1851 = vmatpush1.bf16.msra.mxu0 %v1831
    %1852 = vmatprep.subr.bf16.mxu0 0
    %1853 = vmatpush1.bf16.msra.mxu0 %v1832
    %1854 = vmatprep.subr.bf16.mxu0 0
    %1855 = vmatpush1.bf16.msra.mxu0 %v1833
    %1856 = vmatprep.subr.bf16.mxu0 0
    %1857 = vmatpush1.bf16.msra.mxu0 %v1834
    %1858 = vmatprep.subr.bf16.mxu0 0
    %1859 = vmatpush1.bf16.msra.mxu0 %v1835
    %1860 = vmatprep.subr.bf16.mxu0 0
    %1861 = vmatpush1.bf16.msra.mxu0 0
    %1862 = vmatprep.subr.bf16.mxu0 0
    %1863 = vmatpush1.bf16.msra.mxu0 0
    %1864 = vmatprep.subr.bf16.mxu0 0
    %1865 = vmatpush1.bf16.msra.mxu0 0
    %1866 = vmatprep.subr.bf16.mxu0 0
    %1867 = vmatpush1.bf16.msra.mxu0 0
    %1868 = vmatprep.subr.bf16.mxu0 0
    %1869 = vmatpush1.bf16.msra.mxu0 0
    %1870 = vmatprep.subr.bf16.mxu0 0
    %1871 = vmatpush1.bf16.msra.mxu0 0
    %1872 = vmatprep.subr.bf16.mxu0 0
    %1873 = vmatpush1.bf16.msra.mxu0 0
    %1874 = vmatprep.subr.bf16.mxu0 0
    %1875 = vmatpush1.bf16.msra.mxu0 0
    %1876 = vmatprep.mubr.bf16.mxu0 0
    %1877 = vmatmul.mubr.bf16.gmra.mrb[0].mxu0 %v1765
    %v1878 = vpop.f32.mrb[0].mxu0
    %v1879 = vadd.f32 %v1794, %v1878
    %v1880 = vpop.f32.mrb[0].mxu0
    %v1881 = vpop.f32.mrb[0].mxu0
    %v1882 = vadd.f32 %v1794, %v1881
    %v1883 = vpop.f32.mrb[0].mxu0
    %1884 = vmatprep.mubr.bf16.mxu0 0
    %1885 = vmatmul.mubr.bf16.gmra.mrb[0].mxu0 %v1766
    %v1886 = vpop.f32.mrb[0].mxu0
    %v1887 = vadd.f32 %v1794, %v1886
    %v1888 = vpop.f32.mrb[0].mxu0
    %v1889 = vpop.f32.mrb[0].mxu0
    %v1890 = vadd.f32 %v1794, %v1889
    %v1891 = vpop.f32.mrb[0].mxu0
    %1892 = vmatprep.mubr.bf16.mxu0 0
    %1893 = vmatmul.mubr.bf16.gmra.mrb[0].mxu0 %v1767
    %v1894 = vpop.f32.mrb[0].mxu0
    %v1895 = vadd.f32 %v1794, %v1894
    %v1896 = vpop.f32.mrb[0].mxu0
    %v1897 = vpop.f32.mrb[0].mxu0
    %v1898 = vadd.f32 %v1794, %v1897
    %v1899 = vpop.f32.mrb[0].mxu0
    %1900 = vmatprep.mubr.bf16.mxu0 0
    %1901 = vmatmul.mubr.bf16.gmra.mrb[0].mxu0 %v1768
    %v1902 = vpop.f32.mrb[0].mxu0
    %v1903 = vadd.f32 %v1794, %v1902
    %v1904 = vpop.f32.mrb[0].mxu0
    %v1905 = vpop.f32.mrb[0].mxu0
    %v1906 = vadd.f32 %v1794, %v1905
    %v1907 = vpop.f32.mrb[0].mxu0
    %1908 = vmatprep.mubr.bf16.mxu0 0
    %1909 = vmatmul.mubr.bf16.gmra.mrb[0].mxu0 %v1769
    %v1910 = vpop.f32.mrb[0].mxu0
    %v1911 = vadd.f32 %v1794, %v1910
    %v1912 = vpop.f32.mrb[0].mxu0
    %v1913 = vpop.f32.mrb[0].mxu0
    %v1914 = vadd.f32 %v1794, %v1913
    %v1915 = vpop.f32.mrb[0].mxu0
    %1916 = vmatprep.mubr.bf16.mxu0 0
    %1917 = vmatmul.mubr.bf16.gmra.mrb[0].mxu0 %v1770
    %v1918 = vpop.f32.mrb[0].mxu0
    %v1919 = vadd.f32 %v1794, %v1918
    %v1920 = vpop.f32.mrb[0].mxu0
    %v1921 = vpop.f32.mrb[0].mxu0
    %v1922 = vadd.f32 %v1794, %v1921
    %v1923 = vpop.f32.mrb[0].mxu0
    %1924 = vmatprep.mubr.bf16.mxu0 0
    %1925 = vmatmul.mubr.bf16.gmra.mrb[0].mxu0 %v1771
    %v1926 = vpop.f32.mrb[0].mxu0
    %v1927 = vadd.f32 %v1794, %v1926
    %v1928 = vpop.f32.mrb[0].mxu0
    %v1929 = vpop.f32.mrb[0].mxu0
    %v1930 = vadd.f32 %v1794, %v1929
    %v1931 = vpop.f32.mrb[0].mxu0
    %1932 = vmatprep.mubr.bf16.mxu0 0
    %1933 = vmatmul.mubr.bf16.gmra.mrb[0].mxu0 %v1772
    %v1934 = vpop.f32.mrb[0].mxu0
    %v1935 = vadd.f32 %v1794, %v1934
    %v1936 = vpop.f32.mrb[0].mxu0
    %v1937 = vpop.f32.mrb[0].mxu0
    %v1938 = vadd.f32 %v1794, %v1937
    %v1939 = vpop.f32.mrb[0].mxu0
    %1940 = vdwg.mxu0
    %v1941 = vmax.f32 %v1879, 0.0
    %v1942 = vmax.f32 %v1882, 0.0
    %v1943 = vmax.f32 %v1887, 0.0
    %v1944 = vmax.f32 %v1890, 0.0
    %v1945 = vmax.f32 %v1895, 0.0
    %v1946 = vmax.f32 %v1898, 0.0
    %v1947 = vmax.f32 %v1903, 0.0
    %v1948 = vmax.f32 %v1906, 0.0
    %v1949 = vmax.f32 %v1911, 0.0
    %v1950 = vmax.f32 %v1914, 0.0
    %v1951 = vmax.f32 %v1919, 0.0
    %v1952 = vmax.f32 %v1922, 0.0
    %v1953 = vmax.f32 %v1927, 0.0
    %v1954 = vmax.f32 %v1930, 0.0
    %v1955 = vmax.f32 %v1935, 0.0
    %v1956 = vmax.f32 %v1938, 0.0
    %v1957 = vpack.c.bf16 %v1942, %v1941
    %v1958 = vpack.c.bf16 %v1944, %v1943
    %v1959 = vpack.c.bf16 %v1946, %v1945
    %v1960 = vpack.c.bf16 %v1948, %v1947
    %v1961 = vpack.c.bf16 %v1950, %v1949
    %v1962 = vpack.c.bf16 %v1952, %v1951
    %v1963 = vpack.c.bf16 %v1954, %v1953
    %v1964 = vpack.c.bf16 %v1956, %v1955
    %v1965 = vld [vmem:[#allocation18] sm:$0xf]
    %v1966 = vld [vmem:[#allocation18 + $0x4] sm:$0xf]
    %v1967 = vld [vmem:[#allocation18 + $0x8] sm:$0xf]
    %v1968 = vld [vmem:[#allocation18 + $0xc] sm:$0xf]
    %v1969 = vld [vmem:[#allocation18 + $0x10] sm:$0xf]
    %v1970 = vld [vmem:[#allocation18 + $0x14] sm:$0xf]
    %v1971 = vld [vmem:[#allocation18 + $0x18] sm:$0xf]
    %v1972 = vld [vmem:[#allocation18 + $0x1c] sm:$0xf]
    %v1973 = vld [vmem:[#allocation18 + $0x20] sm:$0xf]
    %v1974 = vld [vmem:[#allocation18 + $0x24] sm:$0xf]
    %v1975 = vld [vmem:[#allocation18 + $0x28] sm:$0xf]
    %v1976 = vld [vmem:[#allocation18 + $0x2c] sm:$0xf]
    %v1977 = vld [vmem:[#allocation18 + $0x30] sm:$0xf]
    %v1978 = vld [vmem:[#allocation18 + $0x34] sm:$0xf]
    %v1979 = vld [vmem:[#allocation18 + $0x38] sm:$0xf]
    %v1980 = vld [vmem:[#allocation18 + $0x3c] sm:$0xf]
    %v1981 = vld [vmem:[#allocation20] sm:$0x1]
    %v1983 = vlaneseq
    %v1984 = vshrl.u32 %v1983, 7
    %v1985 = vsub.s32 0, %v1984
    %v1986 = vrot.slane %v1981, %v1985
    %v2004 = vunpack.c.l.b16 %v1965
    %v2005 = vunpack.c.l.b16 %v1966
    %v2006 = vunpack.c.l.b16 %v1967
    %v2007 = vunpack.c.l.b16 %v1968
    %v2008 = vunpack.c.l.b16 %v1969
    %v2009 = vunpack.c.l.b16 %v1970
    %v2010 = vunpack.c.l.b16 %v1971
    %v2011 = vunpack.c.l.b16 %v1972
    %v2012 = vunpack.c.l.b16 %v1973
    %v2013 = vunpack.c.l.b16 %v1974
    %v2014 = vunpack.c.l.b16 %v1975
    %v2015 = vunpack.c.l.b16 %v1976
    %v2016 = vunpack.c.l.b16 %v1977
    %v2017 = vunpack.c.l.b16 %v1978
    %v2018 = vunpack.c.l.b16 %v1979
    %v2019 = vunpack.c.l.b16 %v1980
    %v2020 = vpack.c.b16 %v2005, %v2004
    %v2021 = vpack.c.b16 %v2007, %v2006
    %v2022 = vpack.c.b16 %v2009, %v2008
    %v2023 = vpack.c.b16 %v2011, %v2010
    %v2024 = vpack.c.b16 %v2013, %v2012
    %v2025 = vpack.c.b16 %v2015, %v2014
    %v2026 = vpack.c.b16 %v2017, %v2016
    %v2027 = vpack.c.b16 %v2019, %v2018
    %2036 = vmatprep.subr.bf16.mxu0 0
    %2037 = vmatpush1.bf16.msra.mxu0 %v2020
    %2038 = vmatprep.subr.bf16.mxu0 0
    %2039 = vmatpush1.bf16.msra.mxu0 %v2021
    %2040 = vmatprep.subr.bf16.mxu0 0
    %2041 = vmatpush1.bf16.msra.mxu0 %v2022
    %2042 = vmatprep.subr.bf16.mxu0 0
    %2043 = vmatpush1.bf16.msra.mxu0 %v2023
    %2044 = vmatprep.subr.bf16.mxu0 0
    %2045 = vmatpush1.bf16.msra.mxu0 %v2024
    %2046 = vmatprep.subr.bf16.mxu0 0
    %2047 = vmatpush1.bf16.msra.mxu0 %v2025
    %2048 = vmatprep.subr.bf16.mxu0 0
    %2049 = vmatpush1.bf16.msra.mxu0 %v2026
    %2050 = vmatprep.subr.bf16.mxu0 0
    %2051 = vmatpush1.bf16.msra.mxu0 %v2027
    %2052 = vmatprep.subr.bf16.mxu0 0
    %2053 = vmatpush1.bf16.msra.mxu0 0
    %2054 = vmatprep.subr.bf16.mxu0 0
    %2055 = vmatpush1.bf16.msra.mxu0 0
    %2056 = vmatprep.subr.bf16.mxu0 0
    %2057 = vmatpush1.bf16.msra.mxu0 0
    %2058 = vmatprep.subr.bf16.mxu0 0
    %2059 = vmatpush1.bf16.msra.mxu0 0
    %2060 = vmatprep.subr.bf16.mxu0 0
    %2061 = vmatpush1.bf16.msra.mxu0 0
    %2062 = vmatprep.subr.bf16.mxu0 0
    %2063 = vmatpush1.bf16.msra.mxu0 0
    %2064 = vmatprep.subr.bf16.mxu0 0
    %2065 = vmatpush1.bf16.msra.mxu0 0
    %2066 = vmatprep.subr.bf16.mxu0 0
    %2067 = vmatpush1.bf16.msra.mxu0 0
    %2068 = vmatprep.mubr.bf16.mxu0 0
    %2069 = vmatmul.mubr.bf16.gmra.mrb[0].mxu0 %v1957
    %v2070 = vpop.f32.mrb[0].mxu0
    %v2071 = vadd.f32 %v1986, %v2070
    %v2072 = vpop.f32.mrb[0].mxu0
    %v2073 = vpop.f32.mrb[0].mxu0
    %v2074 = vadd.f32 %v1986, %v2073
    %v2075 = vpop.f32.mrb[0].mxu0
    %2076 = vmatprep.mubr.bf16.mxu0 0
    %2077 = vmatmul.mubr.bf16.gmra.mrb[0].mxu0 %v1958
    %v2078 = vpop.f32.mrb[0].mxu0
    %v2079 = vadd.f32 %v1986, %v2078
    %v2080 = vpop.f32.mrb[0].mxu0
    %v2081 = vpop.f32.mrb[0].mxu0
    %v2082 = vadd.f32 %v1986, %v2081
    %v2083 = vpop.f32.mrb[0].mxu0
    %2084 = vmatprep.mubr.bf16.mxu0 0
    %2085 = vmatmul.mubr.bf16.gmra.mrb[0].mxu0 %v1959
    %v2086 = vpop.f32.mrb[0].mxu0
    %v2087 = vadd.f32 %v1986, %v2086
    %v2088 = vpop.f32.mrb[0].mxu0
    %v2089 = vpop.f32.mrb[0].mxu0
    %v2090 = vadd.f32 %v1986, %v2089
    %v2091 = vpop.f32.mrb[0].mxu0
    %2092 = vmatprep.mubr.bf16.mxu0 0
    %2093 = vmatmul.mubr.bf16.gmra.mrb[0].mxu0 %v1960
    %v2094 = vpop.f32.mrb[0].mxu0
    %v2095 = vadd.f32 %v1986, %v2094
    %v2096 = vpop.f32.mrb[0].mxu0
    %v2097 = vpop.f32.mrb[0].mxu0
    %v2098 = vadd.f32 %v1986, %v2097
    %v2099 = vpop.f32.mrb[0].mxu0
    %2100 = vmatprep.mubr.bf16.mxu0 0
    %2101 = vmatmul.mubr.bf16.gmra.mrb[0].mxu0 %v1961
    %v2102 = vpop.f32.mrb[0].mxu0
    %v2103 = vadd.f32 %v1986, %v2102
    %v2104 = vpop.f32.mrb[0].mxu0
    %v2105 = vpop.f32.mrb[0].mxu0
    %v2106 = vadd.f32 %v1986, %v2105
    %v2107 = vpop.f32.mrb[0].mxu0
    %2108 = vmatprep.mubr.bf16.mxu0 0
    %2109 = vmatmul.mubr.bf16.gmra.mrb[0].mxu0 %v1962
    %v2110 = vpop.f32.mrb[0].mxu0
    %v2111 = vadd.f32 %v1986, %v2110
    %v2112 = vpop.f32.mrb[0].mxu0
    %v2113 = vpop.f32.mrb[0].mxu0
    %v2114 = vadd.f32 %v1986, %v2113
    %v2115 = vpop.f32.mrb[0].mxu0
    %2116 = vmatprep.mubr.bf16.mxu0 0
    %2117 = vmatmul.mubr.bf16.gmra.mrb[0].mxu0 %v1963
    %v2118 = vpop.f32.mrb[0].mxu0
    %v2119 = vadd.f32 %v1986, %v2118
    %v2120 = vpop.f32.mrb[0].mxu0
    %v2121 = vpop.f32.mrb[0].mxu0
    %v2122 = vadd.f32 %v1986, %v2121
    %v2123 = vpop.f32.mrb[0].mxu0
    %2124 = vmatprep.mubr.bf16.mxu0 0
    %2125 = vmatmul.mubr.bf16.gmra.mrb[0].mxu0 %v1964
    %v2126 = vpop.f32.mrb[0].mxu0
    %v2127 = vadd.f32 %v1986, %v2126
    %v2128 = vpop.f32.mrb[0].mxu0
    %v2129 = vpop.f32.mrb[0].mxu0
    %v2130 = vadd.f32 %v1986, %v2129
    %v2131 = vpop.f32.mrb[0].mxu0
    %2132 = vdwg.mxu0
    %2133 = vst [vmem:[#allocation21] sm:$0xff] %v2071
    %2134 = vst [vmem:[#allocation21 + $0x8] sm:$0xff] %v2074
    %2135 = vst [vmem:[#allocation21 + $0x10] sm:$0xff] %v2079
    %2136 = vst [vmem:[#allocation21 + $0x18] sm:$0xff] %v2082
    %2137 = vst [vmem:[#allocation21 + $0x20] sm:$0xff] %v2087
    %2138 = vst [vmem:[#allocation21 + $0x28] sm:$0xff] %v2090
    %2139 = vst [vmem:[#allocation21 + $0x30] sm:$0xff] %v2095
    %2140 = vst [vmem:[#allocation21 + $0x38] sm:$0xff] %v2098
    %2141 = vst [vmem:[#allocation21 + $0x40] sm:$0xff] %v2103
    %2142 = vst [vmem:[#allocation21 + $0x48] sm:$0xff] %v2106
    %2143 = vst [vmem:[#allocation21 + $0x50] sm:$0xff] %v2111
    %2144 = vst [vmem:[#allocation21 + $0x58] sm:$0xff] %v2114
    %2145 = vst [vmem:[#allocation21 + $0x60] sm:$0xff] %v2119
    %2146 = vst [vmem:[#allocation21 + $0x68] sm:$0xff] %v2122
    %2147 = vst [vmem:[#allocation21 + $0x70] sm:$0xff] %v2127
    %2148 = vst [vmem:[#allocation21 + $0x78] sm:$0xff] %v2130
    // Predicated region
    $region97: #{hypernd_forward.1} parent=1 // pred_check
      _
    $region98: #{hypernd_forward.1} parent=1 // pred_check_branch
      %2150 = sbr.rel (0) target = $region100
    $region99: #{hypernd_forward.1} parent=1 // pred_region
      %s2152 = ssub.s32 2048, 2048
      %2153 = vsyncadd [#allocation4], %s2152
      %s2154 = sshll.u32 [#allocation21], 4
      %s2155 = int_to_ptr.vmem [resolvable:$true] %s2154
      %2160 = dma.vmem_to_hbm [thread:$0]  %s2155, 2048, %s11, [#allocation4], 128, 128, 8
    $region100: #{hypernd_forward.1} parent=1 // pred_fallthru
      _
    // Predicated region
    $region101: #{hypernd_forward.1} parent=1 // pred_check
      _
    $region102: #{hypernd_forward.1} parent=1 // pred_check_branch
      %2162 = sbr.rel (0) target = $region104
    $region103: #{hypernd_forward.1} parent=1 // pred_region
      %s2164 = ssub.s32 16, 16
      %2165 = vsyncadd [#allocation5], %s2164
      %2168 = dma.smem_to_hbm [#allocation22], 16, %s12, [#allocation5]
    $region104: #{hypernd_forward.1} parent=1 // pred_fallthru
      _
    // Predicated region
    $region105: #{hypernd_forward.1} parent=1 // pred_check
      _
    $region106: #{hypernd_forward.1} parent=1 // pred_check_branch
      %2170 = sbr.rel (0) target = $region108
    $region107: #{hypernd_forward.1} parent=1 // pred_region
      %s2172 = ssub.s32 16, 16
      %2173 = vsyncadd [#allocation24], %s2172
      %2176 = dma.smem_to_hbm [#allocation23], 16, %s13, [#allocation24]
    $region108: #{hypernd_forward.1} parent=1 // pred_fallthru
      _
    // Predicated region
    $region109: #{hypernd_forward.1} parent=1 // pred_check
      _
    $region110: #{hypernd_forward.1} parent=1 // pred_check_branch
      %2178 = sbr.rel (0) target = $region112
    $region111: #{hypernd_forward.1} parent=1 // pred_region
      %2179 = dma.done [#allocation4], 2048
    $region112: #{hypernd_forward.1} parent=1 // pred_fallthru
      _
    // Predicated region
    $region113: #{hypernd_forward.1} parent=1 // pred_check
      _
    $region114: #{hypernd_forward.1} parent=1 // pred_check_branch
      %2181 = sbr.rel (0) target = $region116
    $region115: #{hypernd_forward.1} parent=1 // pred_region
      %2182 = dma.done [#allocation5], 16
    $region116: #{hypernd_forward.1} parent=1 // pred_fallthru
      _
    // Predicated region
    $region117: #{hypernd_forward.1} parent=1 // pred_check
      _
    $region118: #{hypernd_forward.1} parent=1 // pred_check_branch
      %2184 = sbr.rel (0) target = $region120
    $region119: #{hypernd_forward.1} parent=1 // pred_region
      %2185 = dma.done [#allocation24], 16
    $region120: #{hypernd_forward.1} parent=1 // pred_fallthru
      _
    %2186 = sfence
    %2187 = vsyncpa [#allocation3], 1
    %2188 = vsyncpa [#allocation7], 1
    %2189 = vsyncpa [#allocation10], 1
    %2190 = vsyncpa [#allocation13], 1
    %2191 = vsyncpa [#allocation16], 1
    %2192 = vsyncpa [#allocation19], 1
    %2193 = vsyncpa [#allocation4], 1
    %2194 = vsyncpa [#allocation5], 1
    %2195 = vsyncpa [#allocation24], 1

</llo_original>
